<compile_context>
chip_gen: v7x
topology: tpu7x:2x2x1
jax: 0.10.0
libtpu: 0.0.40
codegen_flags: <defaults>
</compile_context>

<pallas_src>
import random
from functools import partial

import jax
import jax.numpy as jnp
from jax.experimental import pallas as pl
from jax.experimental.pallas import tpu as pltpu


def _round_up(x, m):
    return ((x + m - 1) // m) * m


# ----------------------------------------------------------------------------
# Encoder: single-layer LSTM over the whole source sequence, one pallas_call.
# ----------------------------------------------------------------------------
def encoder_kernel(emb_ref,                 # (S, B, E)   bf16
                   wx_ref,                  # (E, 4H)     bf16  fused [i|f|g|o]
                   wh_ref,                  # (H, 4H)     bf16
                   b_ref,                   # (1, 4H)     f32
                   out_ref,                 # (S, B, H)   f32
                   h_ref, c_ref,            # (B, H)      f32
                   xw_ref):                 # scratch (S, B, 4H) f32
    S, B, E = emb_ref.shape
    H = h_ref.shape[1]
    H4 = wx_ref.shape[1]

    # All input-to-hidden contributions as ONE MXU op, off the recurrent chain.
    xw_ref[...] = jnp.dot(emb_ref[...].reshape(S * B, E), wx_ref[...],
                          preferred_element_type=jnp.float32).reshape(S, B, H4)

    wh = wh_ref[...]                                        # hoisted load
    bias = jnp.broadcast_to(b_ref[...], (B, H4))            # hoisted broadcast

    def step(t, carry):
        h, c = carry
        gates = xw_ref[t] + jnp.dot(h.astype(jnp.bfloat16), wh,
                                    preferred_element_type=jnp.float32) + bias
        sig = jax.nn.sigmoid(gates)          # i|f|-|o handled in one 128-lane op
        i = sig[:, 0 * H:1 * H]
        f = sig[:, 1 * H:2 * H]
        o = sig[:, 3 * H:4 * H]
        g = jnp.tanh(gates[:, 2 * H:3 * H])
        c_new = f * c + i * g
        h_new = o * jnp.tanh(c_new)
        out_ref[t] = h_new
        return (h_new, c_new)

    h0 = jnp.zeros((B, H), jnp.float32)
    c0 = jnp.zeros((B, H), jnp.float32)
    hT, cT = jax.lax.fori_loop(0, S, step, (h0, c0))
    h_ref[...] = hT
    c_ref[...] = cT


def run_encoder(emb_sm, wx, wh, b):
    """emb_sm: (S, B, E) bf16 -> (enc_out (S,B,H) f32, hidden (B,H), cell (B,H))."""
    S, B, _ = emb_sm.shape
    H4 = wx.shape[1]
    H = H4 // 4
    vmem = pl.BlockSpec(memory_space=pltpu.MemorySpace.VMEM)
    return pl.pallas_call(
        encoder_kernel,
        out_shape=(jax.ShapeDtypeStruct((S, B, H), jnp.float32),
                   jax.ShapeDtypeStruct((B, H), jnp.float32),
                   jax.ShapeDtypeStruct((B, H), jnp.float32)),
        in_specs=[vmem, vmem, vmem, vmem],
        out_specs=(vmem, vmem, vmem),
        scratch_shapes=[pltpu.VMEM((S, B, H4), jnp.float32)],
    )(emb_sm, wx, wh, b)


# ----------------------------------------------------------------------------
# Fused decoder: ALL T-1 target steps in one pallas_call, grid=(T-1,).
# ----------------------------------------------------------------------------
def decoder_kernel(tf_ref,                   # SMEM (T-1,) int32 (scalar prefetch)
                   tfemb_ref,                # (1, B, E)  bf16   per-step block
                   enc_ref,                  # (B, Sp, H) bf16   resident
                   mask_ref,                 # (B, Sp)    f32    resident
                   decemb_ref,               # (Vp, E)    bf16   resident
                   wah_ref, wae_ref,         # (H, H)     bf16   resident
                   va_ref,                   # (1, H)     f32    resident
                   wl_ref, bl_ref,           # (E+2H, 4H) bf16, (1, 4H) f32
                   wo_ref, bo_ref,           # (E+2H, Vp) bf16, (1, Vp) f32
                   h0_ref, c0_ref,           # (B, H)     f32
                   logits_ref, attn_ref,     # (1,B,Vp) f32, (1,B,Sp) f32
                   h_sc, c_sc, pemb_sc, eproj_sc):
    k = pl.program_id(0)
    B, Sp, H = enc_ref.shape
    Vp = logits_ref.shape[2]

    @pl.when(k == 0)
    def _init():
        h_sc[...] = h0_ref[...]
        c_sc[...] = c0_ref[...]
        pemb_sc[...] = jnp.zeros_like(pemb_sc)
        # step-invariant attention projection enc @ Wae, computed once.
        enc_flat = enc_ref[...].reshape(B * Sp, H)
        eproj_sc[...] = jnp.dot(enc_flat, wae_ref[...],
                                preferred_element_type=jnp.float32
                                ).reshape(B, Sp, H)

    h = h_sc[...]
    c = c_sc[...]

    # input embedding: teacher-forced token vs previous-step greedy argmax.
    use_tf = (tf_ref[k] > 0).astype(jnp.float32)
    emb = use_tf * tfemb_ref[0].astype(jnp.float32) + (1.0 - use_tf) * pemb_sc[...]

    # --- additive (Bahdanau) attention over (padded) source positions -------
    h_proj = jnp.dot(h.astype(jnp.bfloat16), wah_ref[...],
                     preferred_element_type=jnp.float32)               # (B, H)
    energy = jnp.tanh(eproj_sc[...] + h_proj[:, None, :])              # (B, Sp, H)
    scores = jnp.sum(energy * va_ref[...].reshape(1, 1, H), axis=-1)   # (B, Sp)
    scores = jnp.where(mask_ref[...] > 0.5, scores, -1e10)
    scores = scores - jnp.max(scores, axis=-1, keepdims=True)
    ex = jnp.exp(scores)
    denom = jnp.sum(ex, axis=-1, keepdims=True)
    r = pl.reciprocal(denom, approx=True)      # EUP slot; Newton refine to f32
    r = r * (2.0 - denom * r)
    r = r * (2.0 - denom * r)
    attn = ex * r                                                      # (B, Sp)
    context = jnp.sum(attn[:, :, None] * enc_ref[...].astype(jnp.float32),
                      axis=1)                                          # (B, H)

    # --- fused LSTM cell on [emb ; context ; h] ------------------------------
    xin = jnp.concatenate([emb, context, h], axis=-1).astype(jnp.bfloat16)
    gates = jnp.dot(xin, wl_ref[...],
                    preferred_element_type=jnp.float32) + bl_ref[...]  # (B, 4H)
    sig = jax.nn.sigmoid(gates)
    i = sig[:, 0 * H:1 * H]
    f = sig[:, 1 * H:2 * H]
    o = sig[:, 3 * H:4 * H]
    g = jnp.tanh(gates[:, 2 * H:3 * H])
    c_new = f * c + i * g
    h_new = o * jnp.tanh(c_new)

    # --- fused output projection on [emb ; context ; h_new] ------------------
    xout = jnp.concatenate([emb, context, h_new], axis=-1).astype(jnp.bfloat16)
    logits = jnp.dot(xout, wo_ref[...],
                     preferred_element_type=jnp.float32) + bo_ref[...]  # (B, Vp)

    logits_ref[0] = logits
    attn_ref[0] = attn
    h_sc[...] = h_new
    c_sc[...] = c_new

    # greedy next-token embedding (used when the next step is not teacher-forced)
    mx = jnp.max(logits, axis=-1, keepdims=True)
    lane = jax.lax.broadcasted_iota(jnp.int32, (B, Vp), 1).astype(jnp.float32)
    cand = jnp.where(logits == mx, lane, jnp.float32(Vp))
    top1 = jnp.min(cand, axis=-1, keepdims=True)          # first-max tie break
    onehot = (lane == top1).astype(jnp.bfloat16)
    pemb_sc[...] = jnp.dot(onehot, decemb_ref[...],
                           preferred_element_type=jnp.float32)


def run_decoder(tf_flags, tf_emb, enc_pad, mask_pad, dec_emb_pad,
                wah, wae, va, dec_w, dec_b, w_out, b_out, h0, c0):
    Tm1, B, E = tf_emb.shape
    _, Sp, H = enc_pad.shape
    Vp = w_out.shape[1]
    H4 = dec_w.shape[1]

    def const2(k, tf): return (0, 0)
    def const3(k, tf): return (0, 0, 0)
    def step3(k, tf): return (k, 0, 0)

    grid_spec = pltpu.PrefetchScalarGridSpec(
        num_scalar_prefetch=1,
        grid=(Tm1,),
        in_specs=[
            pl.BlockSpec((1, B, E), step3),          # teacher-forced embeddings
            pl.BlockSpec((B, Sp, H), const3),        # enc_out (resident)
            pl.BlockSpec((B, Sp), const2),           # mask    (resident)
            pl.BlockSpec((Vp, E), const2),           # decoder embedding table
            pl.BlockSpec((H, H), const2),            # wah
            pl.BlockSpec((H, H), const2),            # wae
            pl.BlockSpec((1, H), const2),            # va
            pl.BlockSpec((E + 2 * H, H4), const2),   # fused LSTM weight
            pl.BlockSpec((1, H4), const2),           # fused LSTM bias
            pl.BlockSpec((E + 2 * H, Vp), const2),   # fused output projection
            pl.BlockSpec((1, Vp), const2),           # output bias (padded -1e9)
            pl.BlockSpec((B, H), const2),            # h0
            pl.BlockSpec((B, H), const2),            # c0
        ],
        out_specs=(
            pl.BlockSpec((1, B, Vp), step3),         # per-step logits (lane-dense)
            pl.BlockSpec((1, B, Sp), step3),         # per-step attention (lane-dense)
        ),
        scratch_shapes=[
            pltpu.VMEM((B, H), jnp.float32),         # hidden carry
            pltpu.VMEM((B, H), jnp.float32),         # cell carry
            pltpu.VMEM((B, E), jnp.float32),         # previous greedy embedding
            pltpu.VMEM((B, Sp, H), jnp.float32),     # enc @ Wae (step-invariant)
        ],
    )
    return pl.pallas_call(
        decoder_kernel,
        grid_spec=grid_spec,
        out_shape=(jax.ShapeDtypeStruct((Tm1, B, Vp), jnp.float32),
                   jax.ShapeDtypeStruct((Tm1, B, Sp), jnp.float32)),
        compiler_params=pltpu.CompilerParams(
            dimension_semantics=("arbitrary",)),     # sequential recurrence
    )(tf_flags, tf_emb, enc_pad, mask_pad, dec_emb_pad, wah, wae, va,
      dec_w, dec_b, w_out, b_out, h0, c0)


# ----------------------------------------------------------------------------
# Seq2Seq forward (mirrors the PyTorch module's forward).
# ----------------------------------------------------------------------------
def make_tf_flags(T, teacher_forcing_ratio):
    """One host random.random() draw per decode step t=1..T-1 (as in the torch
    loop); flags[k] selects the input for grid step k (flags[0]=1 -> trg[:,0])."""
    draws = [random.random() < teacher_forcing_ratio for _ in range(1, T)]
    flags = [1] + [int(d) for d in draws[:T - 2]]
    return jnp.asarray(flags, dtype=jnp.int32)


@partial(jax.jit, static_argnames=("src_pad_idx",))
def seq2seq_forward(src, trg, tf_flags, params, src_pad_idx=0):
    B, S = src.shape
    T = trg.shape[1]
    E = params["enc_emb"].shape[1]
    H = params["wah"].shape[0]
    V_trg = params["w_out"].shape[1]
    Sp = _round_up(S, 128)
    Vp = _round_up(V_trg, 128)

    # ---- encoder -----------------------------------------------------------
    src_emb = jnp.take(params["enc_emb"], src, axis=0)                 # (B,S,E)
    src_emb_sm = jnp.transpose(src_emb, (1, 0, 2)).astype(jnp.bfloat16)
    enc_out_sm, hidden, cell = run_encoder(
        src_emb_sm,
        params["enc_wx"].astype(jnp.bfloat16),
        params["enc_wh"].astype(jnp.bfloat16),
        params["enc_b"])
    enc_out = jnp.transpose(enc_out_sm, (1, 0, 2))                     # (B,S,H)

    # ---- pad to lane-dense shapes for the fused decoder ---------------------
    enc_pad = jnp.zeros((B, Sp, H), jnp.bfloat16).at[:, :S, :].set(
        enc_out.astype(jnp.bfloat16))
    mask = (src != src_pad_idx).astype(jnp.float32)                    # create_mask
    mask_pad = jnp.zeros((B, Sp), jnp.float32).at[:, :S].set(mask)
    dec_emb_pad = jnp.zeros((Vp, E), jnp.bfloat16).at[:V_trg, :].set(
        params["dec_emb"].astype(jnp.bfloat16))
    w_out_pad = jnp.zeros((E + 2 * H, Vp), jnp.bfloat16).at[:, :V_trg].set(
        params["w_out"].astype(jnp.bfloat16))
    b_out_pad = jnp.full((1, Vp), -1e9, jnp.float32).at[:, :V_trg].set(
        params["b_out"])                     # padded lanes never win the argmax

    # teacher-forced token embeddings for steps k = 0..T-2 -> (T-1, B, E)
    tf_emb = jnp.take(params["dec_emb"], trg[:, :T - 1], axis=0)       # (B,T-1,E)
    tf_emb = jnp.transpose(tf_emb, (1, 0, 2)).astype(jnp.bfloat16)

    logits_all, attn_all = run_decoder(
        tf_flags, tf_emb, enc_pad, mask_pad, dec_emb_pad,
        params["wah"].astype(jnp.bfloat16), params["wae"].astype(jnp.bfloat16),
        params["va"],
        params["dec_w"].astype(jnp.bfloat16), params["dec_b"],
        w_out_pad, b_out_pad, hidden, cell)

    logits_bt = jnp.transpose(logits_all, (1, 0, 2))[:, :, :V_trg]     # (B,T-1,V)
    attn_bt = jnp.transpose(attn_all, (1, 0, 2))[:, :, :S]             # (B,T-1,S)
    outputs = jnp.concatenate(
        [jnp.zeros((B, 1, V_trg), jnp.float32), logits_bt], axis=1)
    attentions = jnp.concatenate(
        [jnp.zeros((B, 1, S), jnp.float32), attn_bt], axis=1)
    return outputs, attentions


# ----------------------------------------------------------------------------
# Deterministic parameter initialization (fused weight layouts).
# ----------------------------------------------------------------------------
def init_params(key, v_src, v_trg, e, h):
    shapes = {
        "enc_emb": (v_src, e), "dec_emb": (v_trg, e),
        # encoder LSTM, gates fused [i | f | g | o] along the 4H axis
        "enc_wx": (e, 4 * h), "enc_wh": (h, 4 * h), "enc_b": (1, 4 * h),
        # additive attention
        "wah": (h, h), "wae": (h, h), "va": (1, h),
        # decoder LSTM on [emb ; context ; h], gates fused
        "dec_w": (e + 2 * h, 4 * h), "dec_b": (1, 4 * h),
        # output projection on [emb ; context ; h_new]
        "w_out": (e + 2 * h, v_trg), "b_out": (1, v_trg),
    }
    params = {}
    keys = jax.random.split(key, len(shapes))
    for k, (name, shp) in zip(keys, shapes.items()):
        params[name] = 0.1 * jax.random.normal(k, shp, jnp.float32)
    return params


if __name__ == "__main__":
    B, S, T = 2, 8, 6
    E = H = 32
    V_SRC, V_TRG = 20, 24
    PAD = 0

    root = jax.random.PRNGKey(0)
    pkey, skey, tkey = jax.random.split(root, 3)

    params = init_params(pkey, V_SRC, V_TRG, E, H)
    src = jax.random.randint(skey, (B, S), 1, V_SRC, dtype=jnp.int32)
    src = src.at[:, -2:].set(PAD)                 # trailing padding -> exercises mask
    trg = jax.random.randint(tkey, (B, T), 0, V_TRG, dtype=jnp.int32)

    random.seed(0)                                # deterministic teacher forcing
    tf_flags = make_tf_flags(T, teacher_forcing_ratio=0.5)

    outputs, attentions = seq2seq_forward(src, trg, tf_flags, params,
                                          src_pad_idx=PAD)
    outputs, attentions = jax.block_until_ready((outputs, attentions))

    assert outputs.shape == (B, T, V_TRG)
    assert attentions.shape == (B, T, S)
    assert bool(jnp.all(jnp.isfinite(outputs)))
    # attention rows for t>=1 sum to 1 over real source positions
    assert bool(jnp.allclose(attentions[:, 1:].sum(-1), 1.0, atol=1e-5))
    print("KERNEL_OK")
</pallas_src>

<mosaic_0001>
module attributes {stable_mosaic.version = 11 : i64} {
  func.func @encoder_kernel(%arg0: memref<8x2x32xbf16, #tpu.memory_space<vmem>>, %arg1: memref<32x128xbf16, #tpu.memory_space<vmem>>, %arg2: memref<32x128xbf16, #tpu.memory_space<vmem>>, %arg3: memref<1x128xf32, #tpu.memory_space<vmem>>, %arg4: memref<8x2x32xf32, #tpu.memory_space<vmem>>, %arg5: memref<2x32xf32, #tpu.memory_space<vmem>>, %arg6: memref<2x32xf32, #tpu.memory_space<vmem>>, %arg7: memref<8x2x128xf32, #tpu.memory_space<vmem>>) attributes {dimension_semantics = [], scalar_prefetch = 0 : i64, scratch_operands = 1 : i64, tpu.core_type = #tpu.core_type<tc>} {
    %c0 = arith.constant 0 : index
    %c0_0 = arith.constant 0 : index
    %c0_1 = arith.constant 0 : index
    %0 = vector.load %arg0[%c0, %c0_0, %c0_1] : memref<8x2x32xbf16, #tpu.memory_space<vmem>>, vector<8x2x32xbf16>
    %1 = vector.shape_cast %0 : vector<8x2x32xbf16> to vector<16x32xbf16>
    %c0_2 = arith.constant 0 : index
    %c0_3 = arith.constant 0 : index
    %2 = vector.load %arg1[%c0_2, %c0_3] : memref<32x128xbf16, #tpu.memory_space<vmem>>, vector<32x128xbf16>
    %cst = arith.constant dense<0.000000e+00> : vector<16x128xf32>
    %3 = tpu.matmul %1, %2, %cst {dimension_numbers = #tpu.dot_dimension_numbers<[1], [0], [0], [1], [0, 0, 1, 1], [], []>} : vector<16x32xbf16>, vector<32x128xbf16>, vector<16x128xf32> -> vector<16x128xf32>
    %4 = vector.shape_cast %3 : vector<16x128xf32> to vector<8x2x128xf32>
    %c0_4 = arith.constant 0 : index
    %c0_5 = arith.constant 0 : index
    %c0_6 = arith.constant 0 : index
    %5 = vector.load %arg7[%c0_4, %c0_5, %c0_6] : memref<8x2x128xf32, #tpu.memory_space<vmem>>, vector<8x2x128xf32>
    tpu.vector_store %arg7[%c0_4, %c0_5, %c0_6], %4 {strides = array<i32>} : memref<8x2x128xf32, #tpu.memory_space<vmem>>, vector<8x2x128xf32>,
    %c0_7 = arith.constant 0 : index
    %c0_8 = arith.constant 0 : index
    %6 = vector.load %arg2[%c0_7, %c0_8] : memref<32x128xbf16, #tpu.memory_space<vmem>>, vector<32x128xbf16>
    %c0_9 = arith.constant 0 : index
    %c0_10 = arith.constant 0 : index
    %7 = vector.load %arg3[%c0_9, %c0_10] : memref<1x128xf32, #tpu.memory_space<vmem>>, vector<1x128xf32>
    %8 = vector.shape_cast %7 : vector<1x128xf32> to vector<1x128xf32>
    %9 = vector.broadcast %8 : vector<1x128xf32> to vector<2x128xf32>
    %cst_11 = arith.constant 0.000000e+00 : f32
    %10 = vector.broadcast %cst_11 : f32 to vector<2x32xf32>
    %cst_12 = arith.constant 0.000000e+00 : f32
    %11 = vector.broadcast %cst_12 : f32 to vector<2x32xf32>
    %c0_i32 = arith.constant 0 : i32
    %c8_i32 = arith.constant 8 : i32
    %12 = arith.addi %c0_i32, %c8_i32 : i32
    %c1_i32 = arith.constant 1 : i32
    %13:2 = scf.for %arg8 = %c0_i32 to %12 step %c1_i32 iter_args(%arg9 = %10, %arg10 = %11) -> (vector<2x32xf32>, vector<2x32xf32>)  : i32 {
      %16 = arith.index_cast %arg8 : i32 to index
      %c0_18 = arith.constant 0 : index
      %c0_19 = arith.constant 0 : index
      %17 = vector.load %arg7[%16, %c0_18, %c0_19] : memref<8x2x128xf32, #tpu.memory_space<vmem>>, vector<1x2x128xf32>
      %18 = vector.shape_cast %17 : vector<1x2x128xf32> to vector<2x128xf32>
      %19 = arith.truncf %arg9 : vector<2x32xf32> to vector<2x32xbf16>
      %cst_20 = arith.constant dense<0.000000e+00> : vector<2x128xf32>
      %20 = tpu.matmul %19, %6, %cst_20 {dimension_numbers = #tpu.dot_dimension_numbers<[1], [0], [0], [1], [0, 0, 1, 1], [], []>} : vector<2x32xbf16>, vector<32x128xbf16>, vector<2x128xf32> -> vector<2x128xf32>
      %21 = arith.addf %18, %20 : vector<2x128xf32>
      %22 = arith.addf %21, %9 : vector<2x128xf32>
      %23 = arith.negf %22 : vector<2x128xf32>
      %24 = math.exp %23 : vector<2x128xf32>
      %cst_21 = arith.constant 1.000000e+00 : f32
      %25 = vector.broadcast %cst_21 : f32 to vector<2x128xf32>
      %26 = arith.addf %25, %24 : vector<2x128xf32>
      %27 = arith.divf %25, %26 : vector<2x128xf32>
      %28 = vector.extract_strided_slice %27 {offsets = [0, 0], sizes = [2, 32], strides = [1, 1]} : vector<2x128xf32> to vector<2x32xf32>
      %29 = vector.extract_strided_slice %27 {offsets = [0, 32], sizes = [2, 32], strides = [1, 1]} : vector<2x128xf32> to vector<2x32xf32>
      %30 = vector.extract_strided_slice %27 {offsets = [0, 96], sizes = [2, 32], strides = [1, 1]} : vector<2x128xf32> to vector<2x32xf32>
      %31 = vector.extract_strided_slice %22 {offsets = [0, 64], sizes = [2, 32], strides = [1, 1]} : vector<2x128xf32> to vector<2x32xf32>
      %32 = math.tanh %31 : vector<2x32xf32>
      %33 = arith.mulf %29, %arg10 : vector<2x32xf32>
      %34 = arith.mulf %28, %32 : vector<2x32xf32>
      %35 = arith.addf %33, %34 : vector<2x32xf32>
      %36 = math.tanh %35 : vector<2x32xf32>
      %37 = arith.mulf %30, %36 : vector<2x32xf32>
      %38 = arith.index_cast %arg8 : i32 to index
      %c0_22 = arith.constant 0 : index
      %c0_23 = arith.constant 0 : index
      %39 = vector.load %arg4[%38, %c0_22, %c0_23] : memref<8x2x32xf32, #tpu.memory_space<vmem>>, vector<1x2x32xf32>
      %40 = vector.shape_cast %39 : vector<1x2x32xf32> to vector<2x32xf32>
      %41 = vector.shape_cast %37 : vector<2x32xf32> to vector<1x2x32xf32>
      tpu.vector_store %arg4[%38, %c0_22, %c0_23], %41 {strides = array<i32>} : memref<8x2x32xf32, #tpu.memory_space<vmem>>, vector<1x2x32xf32>,
      scf.yield %37, %35 : vector<2x32xf32>, vector<2x32xf32>
    }
    %c8_i32_13 = arith.constant 8 : i32
    %c0_14 = arith.constant 0 : index
    %c0_15 = arith.constant 0 : index
    %14 = vector.load %arg5[%c0_14, %c0_15] : memref<2x32xf32, #tpu.memory_space<vmem>>, vector<2x32xf32>
    tpu.vector_store %arg5[%c0_14, %c0_15], %13#0 {strides = array<i32>} : memref<2x32xf32, #tpu.memory_space<vmem>>, vector<2x32xf32>,
    %c0_16 = arith.constant 0 : index
    %c0_17 = arith.constant 0 : index
    %15 = vector.load %arg6[%c0_16, %c0_17] : memref<2x32xf32, #tpu.memory_space<vmem>>, vector<2x32xf32>
    tpu.vector_store %arg6[%c0_16, %c0_17], %13#1 {strides = array<i32>} : memref<2x32xf32, #tpu.memory_space<vmem>>, vector<2x32xf32>,
    return
  }
}

module attributes {stable_mosaic.version = 11 : i64} {
  func.func @decoder_kernel(%arg0: i32, %arg1: memref<5xi32, #tpu.memory_space<smem>>, %arg2: memref<1x2x32xbf16, #tpu.memory_space<vmem>>, %arg3: memref<2x128x32xbf16, #tpu.memory_space<vmem>>, %arg4: memref<2x128xf32, #tpu.memory_space<vmem>>, %arg5: memref<128x32xbf16, #tpu.memory_space<vmem>>, %arg6: memref<32x32xbf16, #tpu.memory_space<vmem>>, %arg7: memref<32x32xbf16, #tpu.memory_space<vmem>>, %arg8: memref<1x32xf32, #tpu.memory_space<vmem>>, %arg9: memref<96x128xbf16, #tpu.memory_space<vmem>>, %arg10: memref<1x128xf32, #tpu.memory_space<vmem>>, %arg11: memref<96x128xbf16, #tpu.memory_space<vmem>>, %arg12: memref<1x128xf32, #tpu.memory_space<vmem>>, %arg13: memref<2x32xf32, #tpu.memory_space<vmem>>, %arg14: memref<2x32xf32, #tpu.memory_space<vmem>>, %arg15: memref<1x2x128xf32, #tpu.memory_space<vmem>>, %arg16: memref<1x2x128xf32, #tpu.memory_space<vmem>>, %arg17: memref<2x32xf32, #tpu.memory_space<vmem>>, %arg18: memref<2x32xf32, #tpu.memory_space<vmem>>, %arg19: memref<2x32xf32, #tpu.memory_space<vmem>>, %arg20: memref<2x128x32xf32, #tpu.memory_space<vmem>>) attributes {dimension_semantics = [#tpu.dimension_semantics<arbitrary>], iteration_bounds = array<i64: 5>, scalar_prefetch = 1 : i64, scratch_operands = 4 : i64, tpu.core_type = #tpu.core_type<tc>, window_params = [{transform_indices = @transform_0, window_bounds = array<i64: 1, 2, 32>}, {pipeline_mode = #tpu.pipeline_mode<synchronous>, transform_indices = @transform_1, window_bounds = array<i64: 2, 128, 32>}, {pipeline_mode = #tpu.pipeline_mode<synchronous>, transform_indices = @transform_2, window_bounds = array<i64: 2, 128>}, {pipeline_mode = #tpu.pipeline_mode<synchronous>, transform_indices = @transform_3, window_bounds = array<i64: 128, 32>}, {pipeline_mode = #tpu.pipeline_mode<synchronous>, transform_indices = @transform_4, window_bounds = array<i64: 32, 32>}, {pipeline_mode = #tpu.pipeline_mode<synchronous>, transform_indices = @transform_5, window_bounds = array<i64: 32, 32>}, {pipeline_mode = #tpu.pipeline_mode<synchronous>, transform_indices = @transform_6, window_bounds = array<i64: 1, 32>}, {pipeline_mode = #tpu.pipeline_mode<synchronous>, transform_indices = @transform_7, window_bounds = array<i64: 96, 128>}, {pipeline_mode = #tpu.pipeline_mode<synchronous>, transform_indices = @transform_8, window_bounds = array<i64: 1, 128>}, {pipeline_mode = #tpu.pipeline_mode<synchronous>, transform_indices = @transform_9, window_bounds = array<i64: 96, 128>}, {pipeline_mode = #tpu.pipeline_mode<synchronous>, transform_indices = @transform_10, window_bounds = array<i64: 1, 128>}, {pipeline_mode = #tpu.pipeline_mode<synchronous>, transform_indices = @transform_11, window_bounds = array<i64: 2, 32>}, {pipeline_mode = #tpu.pipeline_mode<synchronous>, transform_indices = @transform_12, window_bounds = array<i64: 2, 32>}, {transform_indices = @transform_13, window_bounds = array<i64: 1, 2, 128>}, {transform_indices = @transform_14, window_bounds = array<i64: 1, 2, 128>}]} {
    %c0_i32 = arith.constant 0 : i32
    %0 = arith.cmpi eq, %arg0, %c0_i32 : i32
    %1 = arith.extui %0 : i1 to i32
    %c0_i32_0 = arith.constant 0 : i32
    %2 = arith.cmpi ne, %1, %c0_i32_0 : i32
    scf.if %2 {
      %c0_60 = arith.constant 0 : index
      %c0_61 = arith.constant 0 : index
      %117 = vector.load %arg13[%c0_60, %c0_61] : memref<2x32xf32, #tpu.memory_space<vmem>>, vector<2x32xf32>
      %c0_62 = arith.constant 0 : index
      %c0_63 = arith.constant 0 : index
      %118 = vector.load %arg17[%c0_62, %c0_63] : memref<2x32xf32, #tpu.memory_space<vmem>>, vector<2x32xf32>
      tpu.vector_store %arg17[%c0_62, %c0_63], %117 {strides = array<i32>} : memref<2x32xf32, #tpu.memory_space<vmem>>, vector<2x32xf32>,
      %c0_64 = arith.constant 0 : index
      %c0_65 = arith.constant 0 : index
      %119 = vector.load %arg14[%c0_64, %c0_65] : memref<2x32xf32, #tpu.memory_space<vmem>>, vector<2x32xf32>
      %c0_66 = arith.constant 0 : index
      %c0_67 = arith.constant 0 : index
      %120 = vector.load %arg18[%c0_66, %c0_67] : memref<2x32xf32, #tpu.memory_space<vmem>>, vector<2x32xf32>
      tpu.vector_store %arg18[%c0_66, %c0_67], %119 {strides = array<i32>} : memref<2x32xf32, #tpu.memory_space<vmem>>, vector<2x32xf32>,
      %cst_68 = arith.constant 0.000000e+00 : f32
      %121 = vector.broadcast %cst_68 : f32 to vector<2x32xf32>
      %c0_69 = arith.constant 0 : index
      %c0_70 = arith.constant 0 : index
      %122 = vector.load %arg19[%c0_69, %c0_70] : memref<2x32xf32, #tpu.memory_space<vmem>>, vector<2x32xf32>
      tpu.vector_store %arg19[%c0_69, %c0_70], %121 {strides = array<i32>} : memref<2x32xf32, #tpu.memory_space<vmem>>, vector<2x32xf32>,
      %c0_71 = arith.constant 0 : index
      %c0_72 = arith.constant 0 : index
      %c0_73 = arith.constant 0 : index
      %123 = vector.load %arg3[%c0_71, %c0_72, %c0_73] : memref<2x128x32xbf16, #tpu.memory_space<vmem>>, vector<2x128x32xbf16>
      %124 = vector.shape_cast %123 : vector<2x128x32xbf16> to vector<256x32xbf16>
      %c0_74 = arith.constant 0 : index
      %c0_75 = arith.constant 0 : index
      %125 = vector.load %arg7[%c0_74, %c0_75] : memref<32x32xbf16, #tpu.memory_space<vmem>>, vector<32x32xbf16>
      %cst_76 = arith.constant dense<0.000000e+00> : vector<256x32xf32>
      %126 = tpu.matmul %124, %125, %cst_76 {dimension_numbers = #tpu.dot_dimension_numbers<[1], [0], [0], [1], [0, 0, 1, 1], [], []>} : vector<256x32xbf16>, vector<32x32xbf16>, vector<256x32xf32> -> vector<256x32xf32>
      %127 = vector.shape_cast %126 : vector<256x32xf32> to vector<2x128x32xf32>
      %c0_77 = arith.constant 0 : index
      %c0_78 = arith.constant 0 : index
      %c0_79 = arith.constant 0 : index
      %128 = vector.load %arg20[%c0_77, %c0_78, %c0_79] : memref<2x128x32xf32, #tpu.memory_space<vmem>>, vector<2x128x32xf32>
      tpu.vector_store %arg20[%c0_77, %c0_78, %c0_79], %127 {strides = array<i32>} : memref<2x128x32xf32, #tpu.memory_space<vmem>>, vector<2x128x32xf32>,
    } else {
    }
    %c0 = arith.constant 0 : index
    %c0_1 = arith.constant 0 : index
    %3 = vector.load %arg17[%c0, %c0_1] : memref<2x32xf32, #tpu.memory_space<vmem>>, vector<2x32xf32>
    %c0_2 = arith.constant 0 : index
    %c0_3 = arith.constant 0 : index
    %4 = vector.load %arg18[%c0_2, %c0_3] : memref<2x32xf32, #tpu.memory_space<vmem>>, vector<2x32xf32>
    %5 = arith.index_cast %arg0 : i32 to index
    %6 = memref.load %arg1[%5] : memref<5xi32, #tpu.memory_space<smem>>
    %c0_i32_4 = arith.constant 0 : i32
    %7 = arith.cmpi sgt, %6, %c0_i32_4 : i32
    %8 = arith.extui %7 : i1 to i32
    %9 = arith.sitofp %8 : i32 to f32
    %c0_5 = arith.constant 0 : index
    %c0_6 = arith.constant 0 : index
    %c0_7 = arith.constant 0 : index
    %10 = vector.load %arg2[%c0_5, %c0_6, %c0_7] : memref<1x2x32xbf16, #tpu.memory_space<vmem>>, vector<1x2x32xbf16>
    %11 = vector.shape_cast %10 : vector<1x2x32xbf16> to vector<2x32xbf16>
    %12 = arith.extf %11 : vector<2x32xbf16> to vector<2x32xf32>
    %13 = vector.broadcast %9 : f32 to vector<2x32xf32>
    %14 = arith.mulf %13, %12 : vector<2x32xf32>
    %cst = arith.constant 1.000000e+00 : f32
    %15 = arith.subf %cst, %9 : f32
    %c0_8 = arith.constant 0 : index
    %c0_9 = arith.constant 0 : index
    %16 = vector.load %arg19[%c0_8, %c0_9] : memref<2x32xf32, #tpu.memory_space<vmem>>, vector<2x32xf32>
    %17 = vector.broadcast %15 : f32 to vector<2x32xf32>
    %18 = arith.mulf %17, %16 : vector<2x32xf32>
    %19 = arith.addf %14, %18 : vector<2x32xf32>
    %20 = arith.truncf %3 : vector<2x32xf32> to vector<2x32xbf16>
    %c0_10 = arith.constant 0 : index
    %c0_11 = arith.constant 0 : index
    %21 = vector.load %arg6[%c0_10, %c0_11] : memref<32x32xbf16, #tpu.memory_space<vmem>>, vector<32x32xbf16>
    %cst_12 = arith.constant dense<0.000000e+00> : vector<2x32xf32>
    %22 = tpu.matmul %20, %21, %cst_12 {dimension_numbers = #tpu.dot_dimension_numbers<[1], [0], [0], [1], [0, 0, 1, 1], [], []>} : vector<2x32xbf16>, vector<32x32xbf16>, vector<2x32xf32> -> vector<2x32xf32>
    %c0_13 = arith.constant 0 : index
    %c0_14 = arith.constant 0 : index
    %c0_15 = arith.constant 0 : index
    %23 = vector.load %arg20[%c0_13, %c0_14, %c0_15] : memref<2x128x32xf32, #tpu.memory_space<vmem>>, vector<2x128x32xf32>
    %24 = vector.shape_cast %22 : vector<2x32xf32> to vector<2x1x32xf32>
    %25 = vector.broadcast %24 : vector<2x1x32xf32> to vector<2x128x32xf32>
    %26 = arith.addf %23, %25 : vector<2x128x32xf32>
    %27 = math.tanh %26 : vector<2x128x32xf32>
    %c0_16 = arith.constant 0 : index
    %c0_17 = arith.constant 0 : index
    %28 = vector.load %arg8[%c0_16, %c0_17] : memref<1x32xf32, #tpu.memory_space<vmem>>, vector<1x32xf32>
    %29 = vector.shape_cast %28 : vector<1x32xf32> to vector<1x1x32xf32>
    %30 = vector.broadcast %29 : vector<1x1x32xf32> to vector<2x128x32xf32>
    %31 = arith.mulf %27, %30 : vector<2x128x32xf32>
    %cst_18 = arith.constant dense<0.000000e+00> : vector<2x128xf32>
    %32 = vector.multi_reduction <add>, %31, %cst_18 [2] : vector<2x128x32xf32> to vector<2x128xf32>
    %c0_19 = arith.constant 0 : index
    %c0_20 = arith.constant 0 : index
    %33 = vector.load %arg4[%c0_19, %c0_20] : memref<2x128xf32, #tpu.memory_space<vmem>>, vector<2x128xf32>
    %cst_21 = arith.constant 5.000000e-01 : f32
    %34 = vector.broadcast %cst_21 : f32 to vector<2x128xf32>
    %35 = arith.cmpf ogt, %33, %34 : vector<2x128xf32>
    %cst_22 = arith.constant -1.000000e+10 : f32
    %36 = vector.broadcast %cst_22 : f32 to vector<2x128xf32>
    %37 = arith.select %35, %32, %36 : vector<2x128xi1>, vector<2x128xf32>
    %cst_23 = arith.constant dense<0xFF800000> : vector<2xf32>
    %38 = vector.multi_reduction <maximumf>, %37, %cst_23 [1] : vector<2x128xf32> to vector<2xf32>
    %39 = vector.shape_cast %38 : vector<2xf32> to vector<2x1xf32>
    %40 = vector.broadcast %39 : vector<2x1xf32> to vector<2x128xf32>
    %41 = arith.subf %37, %40 : vector<2x128xf32>
    %42 = math.exp %41 : vector<2x128xf32>
    %cst_24 = arith.constant dense<0.000000e+00> : vector<2xf32>
    %43 = vector.multi_reduction <add>, %42, %cst_24 [1] : vector<2x128xf32> to vector<2xf32>
    %44 = vector.shape_cast %43 : vector<2xf32> to vector<2x1xf32>
    %45 = tpu.reciprocal %44 {approx = true} : vector<2x1xf32> -> vector<2x1xf32>
    %46 = arith.mulf %44, %45 : vector<2x1xf32>
    %cst_25 = arith.constant 2.000000e+00 : f32
    %47 = vector.broadcast %cst_25 : f32 to vector<2x1xf32>
    %48 = arith.subf %47, %46 : vector<2x1xf32>
    %49 = arith.mulf %45, %48 : vector<2x1xf32>
    %50 = arith.mulf %44, %49 : vector<2x1xf32>
    %cst_26 = arith.constant 2.000000e+00 : f32
    %51 = vector.broadcast %cst_26 : f32 to vector<2x1xf32>
    %52 = arith.subf %51, %50 : vector<2x1xf32>
    %53 = arith.mulf %49, %52 : vector<2x1xf32>
    %54 = vector.broadcast %53 : vector<2x1xf32> to vector<2x128xf32>
    %55 = arith.mulf %42, %54 : vector<2x128xf32>
    %56 = vector.shape_cast %55 : vector<2x128xf32> to vector<2x128x1xf32>
    %c0_27 = arith.constant 0 : index
    %c0_28 = arith.constant 0 : index
    %c0_29 = arith.constant 0 : index
    %57 = vector.load %arg3[%c0_27, %c0_28, %c0_29] : memref<2x128x32xbf16, #tpu.memory_space<vmem>>, vector<2x128x32xbf16>
    %58 = arith.extf %57 : vector<2x128x32xbf16> to vector<2x128x32xf32>
    %59 = vector.broadcast %56 : vector<2x128x1xf32> to vector<2x128x32xf32>
    %60 = arith.mulf %59, %58 : vector<2x128x32xf32>
    %cst_30 = arith.constant dense<0.000000e+00> : vector<2x32xf32>
    %61 = vector.multi_reduction <add>, %60, %cst_30 [1] : vector<2x128x32xf32> to vector<2x32xf32>
    %62 = tpu.concatenate %19, %61, %3 in 1 : vector<2x32xf32>, vector<2x32xf32>, vector<2x32xf32> -> vector<2x96xf32>
    %63 = arith.truncf %62 : vector<2x96xf32> to vector<2x96xbf16>
    %c0_31 = arith.constant 0 : index
    %c0_32 = arith.constant 0 : index
    %64 = vector.load %arg9[%c0_31, %c0_32] : memref<96x128xbf16, #tpu.memory_space<vmem>>, vector<96x128xbf16>
    %cst_33 = arith.constant dense<0.000000e+00> : vector<2x128xf32>
    %65 = tpu.matmul %63, %64, %cst_33 {dimension_numbers = #tpu.dot_dimension_numbers<[1], [0], [0], [1], [0, 0, 1, 1], [], []>} : vector<2x96xbf16>, vector<96x128xbf16>, vector<2x128xf32> -> vector<2x128xf32>
    %c0_34 = arith.constant 0 : index
    %c0_35 = arith.constant 0 : index
    %66 = vector.load %arg10[%c0_34, %c0_35] : memref<1x128xf32, #tpu.memory_space<vmem>>, vector<1x128xf32>
    %67 = vector.broadcast %66 : vector<1x128xf32> to vector<2x128xf32>
    %68 = arith.addf %65, %67 : vector<2x128xf32>
    %69 = arith.negf %68 : vector<2x128xf32>
    %70 = math.exp %69 : vector<2x128xf32>
    %cst_36 = arith.constant 1.000000e+00 : f32
    %71 = vector.broadcast %cst_36 : f32 to vector<2x128xf32>
    %72 = arith.addf %71, %70 : vector<2x128xf32>
    %73 = arith.divf %71, %72 : vector<2x128xf32>
    %74 = vector.extract_strided_slice %73 {offsets = [0, 0], sizes = [2, 32], strides = [1, 1]} : vector<2x128xf32> to vector<2x32xf32>
    %75 = vector.extract_strided_slice %73 {offsets = [0, 32], sizes = [2, 32], strides = [1, 1]} : vector<2x128xf32> to vector<2x32xf32>
    %76 = vector.extract_strided_slice %73 {offsets = [0, 96], sizes = [2, 32], strides = [1, 1]} : vector<2x128xf32> to vector<2x32xf32>
    %77 = vector.extract_strided_slice %68 {offsets = [0, 64], sizes = [2, 32], strides = [1, 1]} : vector<2x128xf32> to vector<2x32xf32>
    %78 = math.tanh %77 : vector<2x32xf32>
    %79 = arith.mulf %75, %4 : vector<2x32xf32>
    %80 = arith.mulf %74, %78 : vector<2x32xf32>
    %81 = arith.addf %79, %80 : vector<2x32xf32>
    %82 = math.tanh %81 : vector<2x32xf32>
    %83 = arith.mulf %76, %82 : vector<2x32xf32>
    %84 = tpu.concatenate %19, %61, %83 in 1 : vector<2x32xf32>, vector<2x32xf32>, vector<2x32xf32> -> vector<2x96xf32>
    %85 = arith.truncf %84 : vector<2x96xf32> to vector<2x96xbf16>
    %c0_37 = arith.constant 0 : index
    %c0_38 = arith.constant 0 : index
    %86 = vector.load %arg11[%c0_37, %c0_38] : memref<96x128xbf16, #tpu.memory_space<vmem>>, vector<96x128xbf16>
    %cst_39 = arith.constant dense<0.000000e+00> : vector<2x128xf32>
    %87 = tpu.matmul %85, %86, %cst_39 {dimension_numbers = #tpu.dot_dimension_numbers<[1], [0], [0], [1], [0, 0, 1, 1], [], []>} : vector<2x96xbf16>, vector<96x128xbf16>, vector<2x128xf32> -> vector<2x128xf32>
    %c0_40 = arith.constant 0 : index
    %c0_41 = arith.constant 0 : index
    %88 = vector.load %arg12[%c0_40, %c0_41] : memref<1x128xf32, #tpu.memory_space<vmem>>, vector<1x128xf32>
    %89 = vector.broadcast %88 : vector<1x128xf32> to vector<2x128xf32>
    %90 = arith.addf %87, %89 : vector<2x128xf32>
    %c0_42 = arith.constant 0 : index
    %c0_43 = arith.constant 0 : index
    %c0_44 = arith.constant 0 : index
    %91 = vector.load %arg15[%c0_42, %c0_43, %c0_44] : memref<1x2x128xf32, #tpu.memory_space<vmem>>, vector<1x2x128xf32>
    %92 = vector.shape_cast %91 : vector<1x2x128xf32> to vector<2x128xf32>
    %93 = vector.shape_cast %90 : vector<2x128xf32> to vector<1x2x128xf32>
    tpu.vector_store %arg15[%c0_42, %c0_43, %c0_44], %93 {strides = array<i32>} : memref<1x2x128xf32, #tpu.memory_space<vmem>>, vector<1x2x128xf32>,
    %c0_45 = arith.constant 0 : index
    %c0_46 = arith.constant 0 : index
    %c0_47 = arith.constant 0 : index
    %94 = vector.load %arg16[%c0_45, %c0_46, %c0_47] : memref<1x2x128xf32, #tpu.memory_space<vmem>>, vector<1x2x128xf32>
    %95 = vector.shape_cast %94 : vector<1x2x128xf32> to vector<2x128xf32>
    %96 = vector.shape_cast %55 : vector<2x128xf32> to vector<1x2x128xf32>
    tpu.vector_store %arg16[%c0_45, %c0_46, %c0_47], %96 {strides = array<i32>} : memref<1x2x128xf32, #tpu.memory_space<vmem>>, vector<1x2x128xf32>,
    %c0_48 = arith.constant 0 : index
    %c0_49 = arith.constant 0 : index
    %97 = vector.load %arg17[%c0_48, %c0_49] : memref<2x32xf32, #tpu.memory_space<vmem>>, vector<2x32xf32>
    tpu.vector_store %arg17[%c0_48, %c0_49], %83 {strides = array<i32>} : memref<2x32xf32, #tpu.memory_space<vmem>>, vector<2x32xf32>,
    %c0_50 = arith.constant 0 : index
    %c0_51 = arith.constant 0 : index
    %98 = vector.load %arg18[%c0_50, %c0_51] : memref<2x32xf32, #tpu.memory_space<vmem>>, vector<2x32xf32>
    tpu.vector_store %arg18[%c0_50, %c0_51], %81 {strides = array<i32>} : memref<2x32xf32, #tpu.memory_space<vmem>>, vector<2x32xf32>,
    %cst_52 = arith.constant dense<0xFF800000> : vector<2xf32>
    %99 = vector.multi_reduction <maximumf>, %90, %cst_52 [1] : vector<2x128xf32> to vector<2xf32>
    %100 = vector.shape_cast %99 : vector<2xf32> to vector<2x1xf32>
    %101 = tpu.iota {dimensions = array<i32: 1>} : vector<2x128xi32>
    %102 = arith.sitofp %101 : vector<2x128xi32> to vector<2x128xf32>
    %103 = vector.broadcast %100 : vector<2x1xf32> to vector<2x128xf32>
    %104 = arith.cmpf oeq, %90, %103 : vector<2x128xf32>
    %cst_53 = arith.constant 1.280000e+02 : f32
    %105 = vector.broadcast %cst_53 : f32 to vector<2x128xf32>
    %106 = arith.select %104, %102, %105 : vector<2x128xi1>, vector<2x128xf32>
    %cst_54 = arith.constant dense<0x7F800000> : vector<2xf32>
    %107 = vector.multi_reduction <minimumf>, %106, %cst_54 [1] : vector<2x128xf32> to vector<2xf32>
    %108 = vector.shape_cast %107 : vector<2xf32> to vector<2x1xf32>
    %109 = vector.broadcast %108 : vector<2x1xf32> to vector<2x128xf32>
    %110 = arith.cmpf oeq, %102, %109 : vector<2x128xf32>
    %111 = arith.extui %110 : vector<2x128xi1> to vector<2x128xi32>
    %112 = arith.sitofp %111 : vector<2x128xi32> to vector<2x128xf32>
    %113 = arith.truncf %112 : vector<2x128xf32> to vector<2x128xbf16>
    %c0_55 = arith.constant 0 : index
    %c0_56 = arith.constant 0 : index
    %114 = vector.load %arg5[%c0_55, %c0_56] : memref<128x32xbf16, #tpu.memory_space<vmem>>, vector<128x32xbf16>
    %cst_57 = arith.constant dense<0.000000e+00> : vector<2x32xf32>
    %115 = tpu.matmul %113, %114, %cst_57 {dimension_numbers = #tpu.dot_dimension_numbers<[1], [0], [0], [1], [0, 0, 1, 1], [], []>} : vector<2x128xbf16>, vector<128x32xbf16>, vector<2x32xf32> -> vector<2x32xf32>
    %c0_58 = arith.constant 0 : index
    %c0_59 = arith.constant 0 : index
    %116 = vector.load %arg19[%c0_58, %c0_59] : memref<2x32xf32, #tpu.memory_space<vmem>>, vector<2x32xf32>
    tpu.vector_store %arg19[%c0_58, %c0_59], %115 {strides = array<i32>} : memref<2x32xf32, #tpu.memory_space<vmem>>, vector<2x32xf32>,
    return
  }
  func.func @transform_0(%arg0: i32, %arg1: memref<5xi32, #tpu.memory_space<smem>>) -> (i32, i32, i32) {
    %c0_i32 = arith.constant 0 : i32
    %c0_i32_0 = arith.constant 0 : i32
    %c0_i32_1 = arith.constant 0 : i32
    return %arg0, %c0_i32, %c0_i32_0 : i32, i32, i32
  }
  func.func @transform_1(%arg0: i32, %arg1: memref<5xi32, #tpu.memory_space<smem>>) -> (i32, i32, i32) {
    %c0_i32 = arith.constant 0 : i32
    %c0_i32_0 = arith.constant 0 : i32
    %c0_i32_1 = arith.constant 0 : i32
    %c0_i32_2 = arith.constant 0 : i32
    return %c0_i32, %c0_i32_0, %c0_i32_1 : i32, i32, i32
  }
  func.func @transform_2(%arg0: i32, %arg1: memref<5xi32, #tpu.memory_space<smem>>) -> (i32, i32) {
    %c0_i32 = arith.constant 0 : i32
    %c0_i32_0 = arith.constant 0 : i32
    %c0_i32_1 = arith.constant 0 : i32
    return %c0_i32, %c0_i32_0 : i32, i32
  }
  func.func @transform_3(%arg0: i32, %arg1: memref<5xi32, #tpu.memory_space<smem>>) -> (i32, i32) {
    %c0_i32 = arith.constant 0 : i32
    %c0_i32_0 = arith.constant 0 : i32
    %c0_i32_1 = arith.constant 0 : i32
    return %c0_i32, %c0_i32_0 : i32, i32
  }
  func.func @transform_4(%arg0: i32, %arg1: memref<5xi32, #tpu.memory_space<smem>>) -> (i32, i32) {
    %c0_i32 = arith.constant 0 : i32
    %c0_i32_0 = arith.constant 0 : i32
    %c0_i32_1 = arith.constant 0 : i32
    return %c0_i32, %c0_i32_0 : i32, i32
  }
  func.func @transform_5(%arg0: i32, %arg1: memref<5xi32, #tpu.memory_space<smem>>) -> (i32, i32) {
    %c0_i32 = arith.constant 0 : i32
    %c0_i32_0 = arith.constant 0 : i32
    %c0_i32_1 = arith.constant 0 : i32
    return %c0_i32, %c0_i32_0 : i32, i32
  }
  func.func @transform_6(%arg0: i32, %arg1: memref<5xi32, #tpu.memory_space<smem>>) -> (i32, i32) {
    %c0_i32 = arith.constant 0 : i32
    %c0_i32_0 = arith.constant 0 : i32
    %c0_i32_1 = arith.constant 0 : i32
    return %c0_i32, %c0_i32_0 : i32, i32
  }
  func.func @transform_7(%arg0: i32, %arg1: memref<5xi32, #tpu.memory_space<smem>>) -> (i32, i32) {
    %c0_i32 = arith.constant 0 : i32
    %c0_i32_0 = arith.constant 0 : i32
    %c0_i32_1 = arith.constant 0 : i32
    return %c0_i32, %c0_i32_0 : i32, i32
  }
  func.func @transform_8(%arg0: i32, %arg1: memref<5xi32, #tpu.memory_space<smem>>) -> (i32, i32) {
    %c0_i32 = arith.constant 0 : i32
    %c0_i32_0 = arith.constant 0 : i32
    %c0_i32_1 = arith.constant 0 : i32
    return %c0_i32, %c0_i32_0 : i32, i32
  }
  func.func @transform_9(%arg0: i32, %arg1: memref<5xi32, #tpu.memory_space<smem>>) -> (i32, i32) {
    %c0_i32 = arith.constant 0 : i32
    %c0_i32_0 = arith.constant 0 : i32
    %c0_i32_1 = arith.constant 0 : i32
    return %c0_i32, %c0_i32_0 : i32, i32
  }
  func.func @transform_10(%arg0: i32, %arg1: memref<5xi32, #tpu.memory_space<smem>>) -> (i32, i32) {
    %c0_i32 = arith.constant 0 : i32
    %c0_i32_0 = arith.constant 0 : i32
    %c0_i32_1 = arith.constant 0 : i32
    return %c0_i32, %c0_i32_0 : i32, i32
  }
  func.func @transform_11(%arg0: i32, %arg1: memref<5xi32, #tpu.memory_space<smem>>) -> (i32, i32) {
    %c0_i32 = arith.constant 0 : i32
    %c0_i32_0 = arith.constant 0 : i32
    %c0_i32_1 = arith.constant 0 : i32
    return %c0_i32, %c0_i32_0 : i32, i32
  }
  func.func @transform_12(%arg0: i32, %arg1: memref<5xi32, #tpu.memory_space<smem>>) -> (i32, i32) {
    %c0_i32 = arith.constant 0 : i32
    %c0_i32_0 = arith.constant 0 : i32
    %c0_i32_1 = arith.constant 0 : i32
    return %c0_i32, %c0_i32_0 : i32, i32
  }
  func.func @transform_13(%arg0: i32, %arg1: memref<5xi32, #tpu.memory_space<smem>>) -> (i32, i32, i32) {
    %c0_i32 = arith.constant 0 : i32
    %c0_i32_0 = arith.constant 0 : i32
    %c0_i32_1 = arith.constant 0 : i32
    return %arg0, %c0_i32, %c0_i32_0 : i32, i32, i32
  }
  func.func @transform_14(%arg0: i32, %arg1: memref<5xi32, #tpu.memory_space<smem>>) -> (i32, i32, i32) {
    %c0_i32 = arith.constant 0 : i32
    %c0_i32_0 = arith.constant 0 : i32
    %c0_i32_1 = arith.constant 0 : i32
    return %arg0, %c0_i32, %c0_i32_0 : i32, i32, i32
  }
}

</mosaic_0001>

<llo_original>
// kernel: seq2seq_forward.2
$region0: #{seq2seq_forward.2}
  #allocation0 [shape = 'u32[]', space=smem, size = 0x4, offset = 0x4, fixed_abs, tag = 'smem constant byte address 0x4 - core index']
  #allocation1 [shape = 'u32[144,128]{1,0:T(1,128)}', space=vmem, size = 0x12000, scoped, tag = 'internal scratch']
  #allocation2 [shape = 'f32[8,2,128]{2,1,0:T(2,128)}', space=vmem, size = 0x2000, scoped, tag = 'scratch operand']
  %s0 = inlined_call_operand.vmem [shape: bf16[8,2,32], index: 0, kind: input, shape index: {}]
  %s1 = inlined_call_operand.vmem [shape: bf16[32,128], index: 1, kind: input, shape index: {}]
  %s2 = inlined_call_operand.vmem [shape: bf16[32,128], index: 2, kind: input, shape index: {}]
  %s3 = inlined_call_operand.vmem [shape: f32[1,128], index: 3, kind: input, shape index: {}]
  %s4 = inlined_call_operand.vmem [shape: f32[8,2,32], index: 4, kind: output, shape index: {0}]
  %s5 = inlined_call_operand.vmem [shape: f32[2,32], index: 5, kind: output, shape index: {1}]
  %s6 = inlined_call_operand.vmem [shape: f32[2,32], index: 6, kind: output, shape index: {2}]
  %7 = xla_tuple %s4, %s5, %s6
  %s8 = sld [smem:[#allocation0]]
  $region49: #{seq2seq_forward.2} parent=0
    _
  %s10 = ssub.s32 1, %s8
  %s11 = scalar_select 0, %s10, %s8
  // Predicated region
  $region2: #{seq2seq_forward.2} parent=0 // pred_check
    _
  $region3: #{seq2seq_forward.2} parent=0 // pred_check_branch
    %13 = sbr.rel (0) target = $region5
  $region4: #{seq2seq_forward.2} parent=0 // pred_region
    _
  $region5: #{seq2seq_forward.2} parent=0 // pred_fallthru
    _
  // Predicated region
  $region6: #{seq2seq_forward.2} parent=0 // pred_check
    _
  $region7: #{seq2seq_forward.2} parent=0 // pred_check_branch
    %15 = sbr.rel (0) target = $region9
  $region8: #{seq2seq_forward.2} parent=0 // pred_region
    _
  $region9: #{seq2seq_forward.2} parent=0 // pred_fallthru
    _
  // Predicated region
  $region10: #{seq2seq_forward.2} parent=0 // pred_check
    _
  $region11: #{seq2seq_forward.2} parent=0 // pred_check_branch
    %17 = sbr.rel (0) target = $region13
  $region12: #{seq2seq_forward.2} parent=0 // pred_region
    _
  $region13: #{seq2seq_forward.2} parent=0 // pred_fallthru
    _
  // Predicated region
  $region14: #{seq2seq_forward.2} parent=0 // pred_check
    _
  $region15: #{seq2seq_forward.2} parent=0 // pred_check_branch
    %19 = sbr.rel (0) target = $region17
  $region16: #{seq2seq_forward.2} parent=0 // pred_region
    _
  $region17: #{seq2seq_forward.2} parent=0 // pred_fallthru
    _
  %v21 = vld [vmem:[%s0] sm:$0x1]
  %v22 = vld [vmem:[%s0 + $0x1] sm:$0x1]
  %v23 = vld [vmem:[%s0 + $0x2] sm:$0x1]
  %v24 = vld [vmem:[%s0 + $0x3] sm:$0x1]
  %v25 = vld [vmem:[%s0 + $0x4] sm:$0x1]
  %v26 = vld [vmem:[%s0 + $0x5] sm:$0x1]
  %v27 = vld [vmem:[%s0 + $0x6] sm:$0x1]
  %v28 = vld [vmem:[%s0 + $0x7] sm:$0x1]
  %v29 = vld [vmem:[%s1] sm:$0xf]
  %v30 = vld [vmem:[%s1 + $0x4] sm:$0xf]
  %v31 = vld [vmem:[%s1 + $0x8] sm:$0xf]
  %v32 = vld [vmem:[%s1 + $0xc] sm:$0xf]
  %v41 = vcombine.low %v21, %v22
  %v42 = vcombine.low %v23, %v24
  %v43 = vcombine.low %v25, %v26
  %v44 = vcombine.low %v27, %v28
  %v46 = vunpack.c.l.s4 1966171168
  %v47 = vunpack.c.0.s8 %v46
  %v48 = vlaneseq
  %v49 = vshrl.u32 %v48, 7
  %v50 = vsub.s32 %v47, %v49
  %v51 = vrot.slane %v41, %v50
  %v53 = vunpack.c.l.s4 1966171168
  %v54 = vunpack.c.0.s8 %v53
  %v55 = vlaneseq
  %v56 = vshrl.u32 %v55, 7
  %v57 = vsub.s32 %v54, %v56
  %v58 = vrot.slane %v42, %v57
  %v60 = vunpack.c.l.s4 1966171168
  %v61 = vunpack.c.0.s8 %v60
  %v62 = vlaneseq
  %v63 = vshrl.u32 %v62, 7
  %v64 = vsub.s32 %v61, %v63
  %v65 = vrot.slane %v43, %v64
  %v67 = vunpack.c.l.s4 1966171168
  %v68 = vunpack.c.0.s8 %v67
  %v69 = vlaneseq
  %v70 = vshrl.u32 %v69, 7
  %v71 = vsub.s32 %v68, %v70
  %v72 = vrot.slane %v44, %v71
  %v73 = vcombine.low %v51, %v58
  %v74 = vcombine.low %v65, %v72
  %v76 = vunpack.c.l.s4 1966171168
  %v77 = vunpack.c.0.s8 %v76
  %v78 = vlaneseq
  %v79 = vshrl.u32 %v78, 7
  %v80 = vsub.s32 %v77, %v79
  %v81 = vrot.slane %v73, %v80
  %v83 = vunpack.c.l.s4 1966171168
  %v84 = vunpack.c.0.s8 %v83
  %v85 = vlaneseq
  %v86 = vshrl.u32 %v85, 7
  %v87 = vsub.s32 %v84, %v86
  %v88 = vrot.slane %v74, %v87
  %v89 = vcombine.low %v81, %v88
  %v94 = vunpack.c.l.b16 %v29
  %v95 = vunpack.c.l.b16 %v30
  %v96 = vunpack.c.l.b16 %v31
  %v97 = vunpack.c.l.b16 %v32
  %v98 = vpack.c.b16 %v95, %v94
  %v99 = vpack.c.b16 %v97, %v96
  %vm102 = vcmask 261120
  %v104 = vsel %vm102, %v89, 0
  %106 = vmatprep.subr.bf16.mxu0 0
  %107 = vmatpush1.bf16.msra.mxu0 %v98
  %108 = vmatprep.subr.bf16.mxu0 0
  %109 = vmatpush1.bf16.msra.mxu0 %v99
  %110 = vmatprep.subr.bf16.mxu0 0
  %111 = vmatpush1.bf16.msra.mxu0 0
  %112 = vmatprep.subr.bf16.mxu0 0
  %113 = vmatpush1.bf16.msra.mxu0 0
  %114 = vmatprep.subr.bf16.mxu0 0
  %115 = vmatpush1.bf16.msra.mxu0 0
  %116 = vmatprep.subr.bf16.mxu0 0
  %117 = vmatpush1.bf16.msra.mxu0 0
  %118 = vmatprep.subr.bf16.mxu0 0
  %119 = vmatpush1.bf16.msra.mxu0 0
  %120 = vmatprep.subr.bf16.mxu0 0
  %121 = vmatpush1.bf16.msra.mxu0 0
  %122 = vmatprep.subr.bf16.mxu0 0
  %123 = vmatpush1.bf16.msra.mxu0 0
  %124 = vmatprep.subr.bf16.mxu0 0
  %125 = vmatpush1.bf16.msra.mxu0 0
  %126 = vmatprep.subr.bf16.mxu0 0
  %127 = vmatpush1.bf16.msra.mxu0 0
  %128 = vmatprep.subr.bf16.mxu0 0
  %129 = vmatpush1.bf16.msra.mxu0 0
  %130 = vmatprep.subr.bf16.mxu0 0
  %131 = vmatpush1.bf16.msra.mxu0 0
  %132 = vmatprep.subr.bf16.mxu0 0
  %133 = vmatpush1.bf16.msra.mxu0 0
  %134 = vmatprep.subr.bf16.mxu0 0
  %135 = vmatpush1.bf16.msra.mxu0 0
  %136 = vmatprep.subr.bf16.mxu0 0
  %137 = vmatpush1.bf16.msra.mxu0 0
  %138 = vmatprep.mubr.bf16.mxu0 0
  %139 = vmatmul.mubr.bf16.gmra.mrb[0].mxu0 %v104
  %v140 = vpop.f32.mrb[0].mxu0
  %v141 = vadd.f32 0.0, %v140
  %v142 = vpop.f32.mrb[0].mxu0
  %v143 = vpop.f32.mrb[0].mxu0
  %v144 = vadd.f32 0.0, %v143
  %v145 = vpop.f32.mrb[0].mxu0
  %146 = vdwg.mxu0
  %v149 = vcombine.high %v141, %v141
  %v151 = vunpack.c.l.s4 1983009808
  %v152 = vunpack.c.0.s8 %v151
  %v153 = vlaneseq
  %v154 = vshrl.u32 %v153, 7
  %v155 = vsub.s32 %v152, %v154
  %v156 = vrot.slane %v141, %v155
  %v158 = vunpack.c.l.s4 1983009808
  %v159 = vunpack.c.0.s8 %v158
  %v160 = vlaneseq
  %v161 = vshrl.u32 %v160, 7
  %v162 = vsub.s32 %v159, %v161
  %v163 = vrot.slane %v149, %v162
  %v164 = vcombine.high %v156, %v156
  %v165 = vcombine.high %v163, %v163
  %v166 = vcombine.high %v144, %v144
  %v168 = vunpack.c.l.s4 1983009808
  %v169 = vunpack.c.0.s8 %v168
  %v170 = vlaneseq
  %v171 = vshrl.u32 %v170, 7
  %v172 = vsub.s32 %v169, %v171
  %v173 = vrot.slane %v144, %v172
  %v175 = vunpack.c.l.s4 1983009808
  %v176 = vunpack.c.0.s8 %v175
  %v177 = vlaneseq
  %v178 = vshrl.u32 %v177, 7
  %v179 = vsub.s32 %v176, %v178
  %v180 = vrot.slane %v166, %v179
  %v181 = vcombine.high %v173, %v173
  %v182 = vcombine.high %v180, %v180
  %191 = vst [vmem:[#allocation2] sm:$0x3] %v156
  %192 = vst [vmem:[#allocation2 + $0x2] sm:$0x3] %v164
  %193 = vst [vmem:[#allocation2 + $0x4] sm:$0x3] %v163
  %194 = vst [vmem:[#allocation2 + $0x6] sm:$0x3] %v165
  %195 = vst [vmem:[#allocation2 + $0x8] sm:$0x3] %v173
  %196 = vst [vmem:[#allocation2 + $0xa] sm:$0x3] %v181
  %197 = vst [vmem:[#allocation2 + $0xc] sm:$0x3] %v180
  %198 = vst [vmem:[#allocation2 + $0xe] sm:$0x3] %v182
  %v199 = vld [vmem:[%s2] sm:$0xf]
  %v200 = vld [vmem:[%s2 + $0x4] sm:$0xf]
  %v201 = vld [vmem:[%s2 + $0x8] sm:$0xf]
  %v202 = vld [vmem:[%s2 + $0xc] sm:$0xf]
  %v203 = vld [vmem:[%s3] sm:$0x1]
  %v205 = vlaneseq
  %v206 = vshrl.u32 %v205, 7
  %v207 = vsub.s32 0, %v206
  %v208 = vrot.slane %v203, %v207
  loop: start=0, step=1, limit=8
  $region18: #{seq2seq_forward.2} parent=0 // loop_pre_header
    _
  $region19: #{seq2seq_forward.2} parent=0 // loop_header
    %s211 = sphi 0, %s215
    %p212 = scmp.ge.s32.totalorder %s211, 8
    %v216 = vphi 0.0, %v305
    %v217 = vphi 0.0, %v299
  $region20: #{seq2seq_forward.2} parent=0 // loop_header_branch
    %214 = sbr.rel (%p212) target = $region24
  $region21: #{seq2seq_forward.2} parent=0 // loop_body
    %s218 = smul.u32 %s211, 2
    %s219 = scalar_lea.vmem [#allocation2], %s218
    %v220 = vld [vmem:[%s219] sm:$0x3]
    %v221 = vpack.c.bf16 %v216, %v216
    %223 = vrot.lane.b32.xlu0 %v221, 32
    %v224 = vpop.permute.xlu0 %223
    %v229 = vunpack.c.l.b16 %v199
    %v230 = vunpack.c.l.b16 %v200
    %v231 = vunpack.c.l.b16 %v201
    %v232 = vunpack.c.l.b16 %v202
    %v233 = vpack.c.b16 %v230, %v229
    %v234 = vpack.c.b16 %v232, %v231
    %v238 = vsel %vm102, %v224, 0
    %240 = vmatprep.subr.bf16.mxu0 0
    %241 = vmatpush1.bf16.msra.mxu0 %v233
    %242 = vmatprep.subr.bf16.mxu0 0
    %243 = vmatpush1.bf16.msra.mxu0 %v234
    %244 = vmatprep.subr.bf16.mxu0 0
    %245 = vmatpush1.bf16.msra.mxu0 0
    %246 = vmatprep.subr.bf16.mxu0 0
    %247 = vmatpush1.bf16.msra.mxu0 0
    %248 = vmatprep.subr.bf16.mxu0 0
    %249 = vmatpush1.bf16.msra.mxu0 0
    %250 = vmatprep.subr.bf16.mxu0 0
    %251 = vmatpush1.bf16.msra.mxu0 0
    %252 = vmatprep.subr.bf16.mxu0 0
    %253 = vmatpush1.bf16.msra.mxu0 0
    %254 = vmatprep.subr.bf16.mxu0 0
    %255 = vmatpush1.bf16.msra.mxu0 0
    %256 = vmatprep.subr.bf16.mxu0 0
    %257 = vmatpush1.bf16.msra.mxu0 0
    %258 = vmatprep.subr.bf16.mxu0 0
    %259 = vmatpush1.bf16.msra.mxu0 0
    %260 = vmatprep.subr.bf16.mxu0 0
    %261 = vmatpush1.bf16.msra.mxu0 0
    %262 = vmatprep.subr.bf16.mxu0 0
    %263 = vmatpush1.bf16.msra.mxu0 0
    %264 = vmatprep.subr.bf16.mxu0 0
    %265 = vmatpush1.bf16.msra.mxu0 0
    %266 = vmatprep.subr.bf16.mxu0 0
    %267 = vmatpush1.bf16.msra.mxu0 0
    %268 = vmatprep.subr.bf16.mxu0 0
    %269 = vmatpush1.bf16.msra.mxu0 0
    %270 = vmatprep.subr.bf16.mxu0 0
    %271 = vmatpush1.bf16.msra.mxu0 0
    %272 = vmatprep.mubr.bf16.mxu0 0
    %273 = vmatmul.mubr.bf16.gmra.mrb[0].mxu0 %v238
    %v274 = vpop.f32.mrb[0].mxu0
    %v275 = vadd.f32 0.0, %v274
    %v276 = vpop.f32.mrb[0].mxu0
    %v277 = vpop.f32.mrb[0].mxu0
    %v278 = vpop.f32.mrb[0].mxu0
    %279 = vdwg.mxu0
    %v280 = vadd.f32 %v220, %v275
    %v281 = vadd.f32 %v280, %v208
    %v282 = vxor.u32 %v281, 2147483648
    %v283 = vmul.f32 %v282, 1.442695
    %v284 = vpow.pop %v283
    %v285 = vadd.f32 %v284, 1.0
    %v286 = vrcp.pop %v285
    %v287 = vmul.f32 1.0, %v286
    %v288 = vtanh.pop %v281
    %v289 = vmul.f32 %v287, %v217
    %291 = vrot.lane.b32.xlu0 %v288, 64
    %v292 = vpop.permute.xlu0 %291
    %v294 = vmul.f32 %v287, %v292
    %296 = vrot.lane.b32.xlu0 %v294, 32
    %v297 = vpop.permute.xlu0 %296
    %v299 = vadd.f32 %v289, %v297
    %v300 = vtanh.pop %v299
    %302 = vrot.lane.b32.xlu0 %v300, 64
    %v303 = vpop.permute.xlu0 %302
    %v305 = vmul.f32 %v287, %v303
    %307 = vrot.lane.b32.xlu0 %v305, 32
    %v308 = vpop.permute.xlu0 %307
    %s310 = scalar_lea.vmem %s4, %s218
    %vm311 = vcmask 254976
    %312 = vst.msk [vmem:[%s310] sm:$0x3] %vm311, %v308
  $region22: #{seq2seq_forward.2} parent=0 // loop_footer
    %s215 = sadd.s32 1, %s211
  $region23: #{seq2seq_forward.2} parent=0 // loop_footer_branch
    %210 = sbr.rel target = $region19
  $region24: #{seq2seq_forward.2} parent=0 // loop_exit
    _
  %314 = vrot.lane.b32.xlu0 %v216, 32
  %v315 = vpop.permute.xlu0 %314
  %vm317 = vcmask 254976
  %318 = vst.msk [vmem:[%s5] sm:$0x3] %vm317, %v315
  %320 = vrot.lane.b32.xlu0 %v217, 96
  %v321 = vpop.permute.xlu0 %320
  %323 = vst.msk [vmem:[%s6] sm:$0x3] %vm317, %v321
  // Predicated region
  $region25: #{seq2seq_forward.2} parent=0 // pred_check
    _
  $region26: #{seq2seq_forward.2} parent=0 // pred_check_branch
    %325 = sbr.rel (0) target = $region28
  $region27: #{seq2seq_forward.2} parent=0 // pred_region
    _
  $region28: #{seq2seq_forward.2} parent=0 // pred_fallthru
    _
  // Predicated region
  $region29: #{seq2seq_forward.2} parent=0 // pred_check
    _
  $region30: #{seq2seq_forward.2} parent=0 // pred_check_branch
    %327 = sbr.rel (0) target = $region32
  $region31: #{seq2seq_forward.2} parent=0 // pred_region
    _
  $region32: #{seq2seq_forward.2} parent=0 // pred_fallthru
    _
  // Predicated region
  $region33: #{seq2seq_forward.2} parent=0 // pred_check
    _
  $region34: #{seq2seq_forward.2} parent=0 // pred_check_branch
    %329 = sbr.rel (0) target = $region36
  $region35: #{seq2seq_forward.2} parent=0 // pred_region
    _
  $region36: #{seq2seq_forward.2} parent=0 // pred_fallthru
    _
  // Predicated region
  $region37: #{seq2seq_forward.2} parent=0 // pred_check
    _
  $region38: #{seq2seq_forward.2} parent=0 // pred_check_branch
    %331 = sbr.rel (0) target = $region40
  $region39: #{seq2seq_forward.2} parent=0 // pred_region
    _
  $region40: #{seq2seq_forward.2} parent=0 // pred_fallthru
    _
  // Predicated region
  $region41: #{seq2seq_forward.2} parent=0 // pred_check
    _
  $region42: #{seq2seq_forward.2} parent=0 // pred_check_branch
    %333 = sbr.rel (0) target = $region44
  $region43: #{seq2seq_forward.2} parent=0 // pred_region
    _
  $region44: #{seq2seq_forward.2} parent=0 // pred_fallthru
    _
  // Predicated region
  $region45: #{seq2seq_forward.2} parent=0 // pred_check
    _
  $region46: #{seq2seq_forward.2} parent=0 // pred_check_branch
    %335 = sbr.rel (0) target = $region48
  $region47: #{seq2seq_forward.2} parent=0 // pred_region
    _
  $region48: #{seq2seq_forward.2} parent=0 // pred_fallthru
    _

// kernel: seq2seq_forward.3
$region0: #{seq2seq_forward.3}
  #allocation0 [shape = 'u32[]', space=smem, size = 0x4, offset = 0x4, fixed_abs, tag = 'smem constant byte address 0x4 - core index']
  #allocation1 [shape = 'u32[144,128]{1,0:T(1,128)}', space=vmem, size = 0x12000, scoped, tag = 'internal scratch']
  #allocation2 [shape = 'f32[2,32]{1,0:T(2,128)}', space=vmem, size = 0x400, scoped, tag = 'scratch operand']
  #allocation3 [shape = 'f32[2,32]{1,0:T(2,128)}', space=vmem, size = 0x400, scoped, tag = 'scratch operand']
  #allocation4 [shape = 'f32[2,32]{1,0:T(2,128)}', space=vmem, size = 0x400, scoped, tag = 'scratch operand']
  #allocation5 [shape = 'f32[2,128,32]{2,1,0:T(8,128)}', space=vmem, size = 0x20000, scoped, tag = 'scratch operand']
  #allocation6 [shape = 's32[1]{0}', space=sflag, size = 0x4, scoped, tag = 'scoped memory for seq2seq_forward.3']
  #allocation7 [shape = 'u8[512]{0}', space=smem, size = 0x200, scoped, tag = 'prefetched SMEM operand 0']
  %s0 = inlined_call_operand.vmem [shape: s32[5], index: 0, kind: input, shape index: {}]
  %s1 = inlined_call_operand.vmem [shape: bf16[5,2,32], index: 1, kind: input, shape index: {}]
  %s2 = inlined_call_operand.vmem [shape: bf16[2,128,32], index: 2, kind: input, shape index: {}]
  %s3 = inlined_call_operand.vmem [shape: f32[2,128], index: 3, kind: input, shape index: {}]
  %s4 = inlined_call_operand.vmem [shape: bf16[128,32], index: 4, kind: input, shape index: {}]
  %s5 = inlined_call_operand.vmem [shape: bf16[32,32], index: 5, kind: input, shape index: {}]
  %s6 = inlined_call_operand.vmem [shape: bf16[32,32], index: 6, kind: input, shape index: {}]
  %s7 = inlined_call_operand.vmem [shape: f32[1,32], index: 7, kind: input, shape index: {}]
  %s8 = inlined_call_operand.vmem [shape: bf16[96,128], index: 8, kind: input, shape index: {}]
  %s9 = inlined_call_operand.vmem [shape: f32[1,128], index: 9, kind: input, shape index: {}]
  %s10 = inlined_call_operand.vmem [shape: bf16[96,128], index: 10, kind: input, shape index: {}]
  %s11 = inlined_call_operand.vmem [shape: f32[1,128], index: 11, kind: input, shape index: {}]
  %s12 = inlined_call_operand.vmem [shape: f32[2,32], index: 12, kind: input, shape index: {}]
  %s13 = inlined_call_operand.vmem [shape: f32[2,32], index: 13, kind: input, shape index: {}]
  %s14 = inlined_call_operand.vmem [shape: f32[5,2,128], index: 14, kind: output, shape index: {0}]
  %s15 = inlined_call_operand.vmem [shape: f32[5,2,128], index: 15, kind: output, shape index: {1}]
  %16 = xla_tuple %s14, %s15
  %s17 = sld [smem:[#allocation0]]
  $region97: #{seq2seq_forward.3} parent=0
    _
  %s19 = ssub.s32 1, %s17
  %s20 = scalar_select 0, %s19, %s17
  %s21 = sshll.u32 %s0, 4
  %s22 = int_to_ptr.vmem [resolvable:$true] %s21
  %24 = dma.vmem_to_smem %s22, 16, [#allocation7], [#allocation6]
  %25 = dma.done [#allocation6], 16
  %26 = sfence
  loop: start=0, step=1, limit=7
  $region2: #{seq2seq_forward.3} parent=0 // loop_pre_header
    _
  $region3: #{seq2seq_forward.3} parent=0 // loop_header
    %s28 = sphi 0, %s32
    %p29 = scmp.ge.s32.totalorder %s28, 7
    %s38 = sphi 0, %s40
    %s41 = sphi 0, %s38
    %s42 = sphi 0, %s41
    %s58 = sphi 0, %s42
    %s62 = sphi 0, %s62
    %s64 = sphi 0, %s62
    %s65 = sphi 0, %s64
    %s79 = sphi 0, %s65
    %s83 = sphi 0, %s83
    %s85 = sphi 0, %s83
    %s86 = sphi 0, %s85
    %s100 = sphi 0, %s86
    %s104 = sphi 0, %s104
    %s106 = sphi 0, %s104
    %s107 = sphi 0, %s106
    %s121 = sphi 0, %s107
    %s125 = sphi 0, %s125
    %s127 = sphi 0, %s125
    %s128 = sphi 0, %s127
    %s142 = sphi 0, %s128
    %s146 = sphi 0, %s146
    %s148 = sphi 0, %s146
    %s149 = sphi 0, %s148
    %s163 = sphi 0, %s149
    %s167 = sphi 0, %s167
    %s169 = sphi 0, %s167
    %s170 = sphi 0, %s169
    %s184 = sphi 0, %s170
    %s188 = sphi 0, %s188
    %s190 = sphi 0, %s188
    %s191 = sphi 0, %s190
    %s205 = sphi 0, %s191
    %s209 = sphi 0, %s209
    %s211 = sphi 0, %s209
    %s212 = sphi 0, %s211
    %s226 = sphi 0, %s212
    %s230 = sphi 0, %s230
    %s232 = sphi 0, %s230
    %s233 = sphi 0, %s232
    %s247 = sphi 0, %s233
    %s251 = sphi 0, %s251
    %s253 = sphi 0, %s251
    %s254 = sphi 0, %s253
    %s268 = sphi 0, %s254
    %s272 = sphi 0, %s272
    %s274 = sphi 0, %s272
    %s275 = sphi 0, %s274
    %s289 = sphi 0, %s275
    %s293 = sphi 0, %s293
    %s295 = sphi 0, %s293
    %s296 = sphi 0, %s295
    %s310 = sphi 0, %s296
    %s316 = sphi 0, %s318
    %s319 = sphi 0, %s316
    %s320 = sphi 0, %s319
    %s336 = sphi 0, %s320
    %s342 = sphi 0, %s344
    %s345 = sphi 0, %s342
    %s346 = sphi 0, %s345
    %s362 = sphi 0, %s346
  $region4: #{seq2seq_forward.3} parent=0 // loop_header_branch
    %31 = sbr.rel (%p29) target = $region8
  $region5: #{seq2seq_forward.3} parent=0 // loop_body
    %s33 = ssub.s32 %s28, 1
    %s34 = ssub.s32 %s28, 2
    %s35 = sadd.s32 %s28, 1
    %s36 = ssub.s32 %s28, %s35
    %p37 = scmp.eq.s32.totalorder %s36, 0
    %s39 = sadd.s32 %s38, 1
    %s40 = scalar_select %p37, %s38, %s39
    %p43 = pneg %p37
    %p44 = scmp.eq.s32.totalorder %s28, 4
    %p45 = por %p43, %p44
    %p46 = scmp.ne.s32.totalorder %s38, %s41
    %p47 = scmp.eq.s32.totalorder %s28, 0
    %p48 = por %p46, %p47
    %p49 = scmp.ne.s32.totalorder %s38, %s41
    %p50 = scmp.eq.s32.totalorder %s33, 4
    %p51 = por %p49, %p50
    %p52 = scmp.ne.s32.totalorder %s41, %s42
    %p53 = scmp.eq.s32.totalorder %s33, 0
    %p54 = por %p52, %p53
    %p55 = scmp.ne.s32.totalorder %s41, %s42
    %p56 = scmp.eq.s32.totalorder %s34, 4
    %p57 = por %p55, %p56
    %p59 = scmp.ne.s32.totalorder %s42, %s58
    %p60 = scmp.eq.s32.totalorder %s34, 0
    %p61 = por %p59, %p60
    %s63 = sadd.s32 %s62, 1
    %p66 = scmp.eq.s32.totalorder %s28, 4
    %p67 = scmp.ne.s32.totalorder %s62, %s64
    %p68 = scmp.eq.s32.totalorder %s28, 0
    %p69 = por %p67, %p68
    %p70 = scmp.ne.s32.totalorder %s62, %s64
    %p71 = scmp.eq.s32.totalorder %s33, 4
    %p72 = por %p70, %p71
    %p73 = scmp.ne.s32.totalorder %s64, %s65
    %p74 = scmp.eq.s32.totalorder %s33, 0
    %p75 = por %p73, %p74
    %p76 = scmp.ne.s32.totalorder %s64, %s65
    %p77 = scmp.eq.s32.totalorder %s34, 4
    %p78 = por %p76, %p77
    %p80 = scmp.ne.s32.totalorder %s65, %s79
    %p81 = scmp.eq.s32.totalorder %s34, 0
    %p82 = por %p80, %p81
    %s84 = sadd.s32 %s83, 1
    %p87 = scmp.eq.s32.totalorder %s28, 4
    %p88 = scmp.ne.s32.totalorder %s83, %s85
    %p89 = scmp.eq.s32.totalorder %s28, 0
    %p90 = por %p88, %p89
    %p91 = scmp.ne.s32.totalorder %s83, %s85
    %p92 = scmp.eq.s32.totalorder %s33, 4
    %p93 = por %p91, %p92
    %p94 = scmp.ne.s32.totalorder %s85, %s86
    %p95 = scmp.eq.s32.totalorder %s33, 0
    %p96 = por %p94, %p95
    %p97 = scmp.ne.s32.totalorder %s85, %s86
    %p98 = scmp.eq.s32.totalorder %s34, 4
    %p99 = por %p97, %p98
    %p101 = scmp.ne.s32.totalorder %s86, %s100
    %p102 = scmp.eq.s32.totalorder %s34, 0
    %p103 = por %p101, %p102
    %s105 = sadd.s32 %s104, 1
    %p108 = scmp.eq.s32.totalorder %s28, 4
    %p109 = scmp.ne.s32.totalorder %s104, %s106
    %p110 = scmp.eq.s32.totalorder %s28, 0
    %p111 = por %p109, %p110
    %p112 = scmp.ne.s32.totalorder %s104, %s106
    %p113 = scmp.eq.s32.totalorder %s33, 4
    %p114 = por %p112, %p113
    %p115 = scmp.ne.s32.totalorder %s106, %s107
    %p116 = scmp.eq.s32.totalorder %s33, 0
    %p117 = por %p115, %p116
    %p118 = scmp.ne.s32.totalorder %s106, %s107
    %p119 = scmp.eq.s32.totalorder %s34, 4
    %p120 = por %p118, %p119
    %p122 = scmp.ne.s32.totalorder %s107, %s121
    %p123 = scmp.eq.s32.totalorder %s34, 0
    %p124 = por %p122, %p123
    %s126 = sadd.s32 %s125, 1
    %p129 = scmp.eq.s32.totalorder %s28, 4
    %p130 = scmp.ne.s32.totalorder %s125, %s127
    %p131 = scmp.eq.s32.totalorder %s28, 0
    %p132 = por %p130, %p131
    %p133 = scmp.ne.s32.totalorder %s125, %s127
    %p134 = scmp.eq.s32.totalorder %s33, 4
    %p135 = por %p133, %p134
    %p136 = scmp.ne.s32.totalorder %s127, %s128
    %p137 = scmp.eq.s32.totalorder %s33, 0
    %p138 = por %p136, %p137
    %p139 = scmp.ne.s32.totalorder %s127, %s128
    %p140 = scmp.eq.s32.totalorder %s34, 4
    %p141 = por %p139, %p140
    %p143 = scmp.ne.s32.totalorder %s128, %s142
    %p144 = scmp.eq.s32.totalorder %s34, 0
    %p145 = por %p143, %p144
    %s147 = sadd.s32 %s146, 1
    %p150 = scmp.eq.s32.totalorder %s28, 4
    %p151 = scmp.ne.s32.totalorder %s146, %s148
    %p152 = scmp.eq.s32.totalorder %s28, 0
    %p153 = por %p151, %p152
    %p154 = scmp.ne.s32.totalorder %s146, %s148
    %p155 = scmp.eq.s32.totalorder %s33, 4
    %p156 = por %p154, %p155
    %p157 = scmp.ne.s32.totalorder %s148, %s149
    %p158 = scmp.eq.s32.totalorder %s33, 0
    %p159 = por %p157, %p158
    %p160 = scmp.ne.s32.totalorder %s148, %s149
    %p161 = scmp.eq.s32.totalorder %s34, 4
    %p162 = por %p160, %p161
    %p164 = scmp.ne.s32.totalorder %s149, %s163
    %p165 = scmp.eq.s32.totalorder %s34, 0
    %p166 = por %p164, %p165
    %s168 = sadd.s32 %s167, 1
    %p171 = scmp.eq.s32.totalorder %s28, 4
    %p172 = scmp.ne.s32.totalorder %s167, %s169
    %p173 = scmp.eq.s32.totalorder %s28, 0
    %p174 = por %p172, %p173
    %p175 = scmp.ne.s32.totalorder %s167, %s169
    %p176 = scmp.eq.s32.totalorder %s33, 4
    %p177 = por %p175, %p176
    %p178 = scmp.ne.s32.totalorder %s169, %s170
    %p179 = scmp.eq.s32.totalorder %s33, 0
    %p180 = por %p178, %p179
    %p181 = scmp.ne.s32.totalorder %s169, %s170
    %p182 = scmp.eq.s32.totalorder %s34, 4
    %p183 = por %p181, %p182
    %p185 = scmp.ne.s32.totalorder %s170, %s184
    %p186 = scmp.eq.s32.totalorder %s34, 0
    %p187 = por %p185, %p186
    %s189 = sadd.s32 %s188, 1
    %p192 = scmp.eq.s32.totalorder %s28, 4
    %p193 = scmp.ne.s32.totalorder %s188, %s190
    %p194 = scmp.eq.s32.totalorder %s28, 0
    %p195 = por %p193, %p194
    %p196 = scmp.ne.s32.totalorder %s188, %s190
    %p197 = scmp.eq.s32.totalorder %s33, 4
    %p198 = por %p196, %p197
    %p199 = scmp.ne.s32.totalorder %s190, %s191
    %p200 = scmp.eq.s32.totalorder %s33, 0
    %p201 = por %p199, %p200
    %p202 = scmp.ne.s32.totalorder %s190, %s191
    %p203 = scmp.eq.s32.totalorder %s34, 4
    %p204 = por %p202, %p203
    %p206 = scmp.ne.s32.totalorder %s191, %s205
    %p207 = scmp.eq.s32.totalorder %s34, 0
    %p208 = por %p206, %p207
    %s210 = sadd.s32 %s209, 1
    %p213 = scmp.eq.s32.totalorder %s28, 4
    %p214 = scmp.ne.s32.totalorder %s209, %s211
    %p215 = scmp.eq.s32.totalorder %s28, 0
    %p216 = por %p214, %p215
    %p217 = scmp.ne.s32.totalorder %s209, %s211
    %p218 = scmp.eq.s32.totalorder %s33, 4
    %p219 = por %p217, %p218
    %p220 = scmp.ne.s32.totalorder %s211, %s212
    %p221 = scmp.eq.s32.totalorder %s33, 0
    %p222 = por %p220, %p221
    %p223 = scmp.ne.s32.totalorder %s211, %s212
    %p224 = scmp.eq.s32.totalorder %s34, 4
    %p225 = por %p223, %p224
    %p227 = scmp.ne.s32.totalorder %s212, %s226
    %p228 = scmp.eq.s32.totalorder %s34, 0
    %p229 = por %p227, %p228
    %s231 = sadd.s32 %s230, 1
    %p234 = scmp.eq.s32.totalorder %s28, 4
    %p235 = scmp.ne.s32.totalorder %s230, %s232
    %p236 = scmp.eq.s32.totalorder %s28, 0
    %p237 = por %p235, %p236
    %p238 = scmp.ne.s32.totalorder %s230, %s232
    %p239 = scmp.eq.s32.totalorder %s33, 4
    %p240 = por %p238, %p239
    %p241 = scmp.ne.s32.totalorder %s232, %s233
    %p242 = scmp.eq.s32.totalorder %s33, 0
    %p243 = por %p241, %p242
    %p244 = scmp.ne.s32.totalorder %s232, %s233
    %p245 = scmp.eq.s32.totalorder %s34, 4
    %p246 = por %p244, %p245
    %p248 = scmp.ne.s32.totalorder %s233, %s247
    %p249 = scmp.eq.s32.totalorder %s34, 0
    %p250 = por %p248, %p249
    %s252 = sadd.s32 %s251, 1
    %p255 = scmp.eq.s32.totalorder %s28, 4
    %p256 = scmp.ne.s32.totalorder %s251, %s253
    %p257 = scmp.eq.s32.totalorder %s28, 0
    %p258 = por %p256, %p257
    %p259 = scmp.ne.s32.totalorder %s251, %s253
    %p260 = scmp.eq.s32.totalorder %s33, 4
    %p261 = por %p259, %p260
    %p262 = scmp.ne.s32.totalorder %s253, %s254
    %p263 = scmp.eq.s32.totalorder %s33, 0
    %p264 = por %p262, %p263
    %p265 = scmp.ne.s32.totalorder %s253, %s254
    %p266 = scmp.eq.s32.totalorder %s34, 4
    %p267 = por %p265, %p266
    %p269 = scmp.ne.s32.totalorder %s254, %s268
    %p270 = scmp.eq.s32.totalorder %s34, 0
    %p271 = por %p269, %p270
    %s273 = sadd.s32 %s272, 1
    %p276 = scmp.eq.s32.totalorder %s28, 4
    %p277 = scmp.ne.s32.totalorder %s272, %s274
    %p278 = scmp.eq.s32.totalorder %s28, 0
    %p279 = por %p277, %p278
    %p280 = scmp.ne.s32.totalorder %s272, %s274
    %p281 = scmp.eq.s32.totalorder %s33, 4
    %p282 = por %p280, %p281
    %p283 = scmp.ne.s32.totalorder %s274, %s275
    %p284 = scmp.eq.s32.totalorder %s33, 0
    %p285 = por %p283, %p284
    %p286 = scmp.ne.s32.totalorder %s274, %s275
    %p287 = scmp.eq.s32.totalorder %s34, 4
    %p288 = por %p286, %p287
    %p290 = scmp.ne.s32.totalorder %s275, %s289
    %p291 = scmp.eq.s32.totalorder %s34, 0
    %p292 = por %p290, %p291
    %s294 = sadd.s32 %s293, 1
    %p297 = scmp.eq.s32.totalorder %s28, 4
    %p298 = scmp.ne.s32.totalorder %s293, %s295
    %p299 = scmp.eq.s32.totalorder %s28, 0
    %p300 = por %p298, %p299
    %p301 = scmp.ne.s32.totalorder %s293, %s295
    %p302 = scmp.eq.s32.totalorder %s33, 4
    %p303 = por %p301, %p302
    %p304 = scmp.ne.s32.totalorder %s295, %s296
    %p305 = scmp.eq.s32.totalorder %s33, 0
    %p306 = por %p304, %p305
    %p307 = scmp.ne.s32.totalorder %s295, %s296
    %p308 = scmp.eq.s32.totalorder %s34, 4
    %p309 = por %p307, %p308
    %p311 = scmp.ne.s32.totalorder %s296, %s310
    %p312 = scmp.eq.s32.totalorder %s34, 0
    %p313 = por %p311, %p312
    %s314 = ssub.s32 %s28, %s35
    %p315 = scmp.eq.s32.totalorder %s314, 0
    %s317 = sadd.s32 %s316, 1
    %s318 = scalar_select %p315, %s316, %s317
    %p321 = pneg %p315
    %p322 = scmp.eq.s32.totalorder %s28, 4
    %p323 = por %p321, %p322
    %p324 = scmp.ne.s32.totalorder %s316, %s319
    %p325 = scmp.eq.s32.totalorder %s28, 0
    %p326 = por %p324, %p325
    %p327 = scmp.ne.s32.totalorder %s316, %s319
    %p328 = scmp.eq.s32.totalorder %s33, 4
    %p329 = por %p327, %p328
    %p330 = scmp.ne.s32.totalorder %s319, %s320
    %p331 = scmp.eq.s32.totalorder %s33, 0
    %p332 = por %p330, %p331
    %p333 = scmp.ne.s32.totalorder %s319, %s320
    %p334 = scmp.eq.s32.totalorder %s34, 4
    %p335 = por %p333, %p334
    %p337 = scmp.ne.s32.totalorder %s320, %s336
    %p338 = scmp.eq.s32.totalorder %s34, 0
    %p339 = por %p337, %p338
    %s340 = ssub.s32 %s28, %s35
    %p341 = scmp.eq.s32.totalorder %s340, 0
    %s343 = sadd.s32 %s342, 1
    %s344 = scalar_select %p341, %s342, %s343
    %p347 = pneg %p341
    %p348 = scmp.eq.s32.totalorder %s28, 4
    %p349 = por %p347, %p348
    %p350 = scmp.ne.s32.totalorder %s342, %s345
    %p351 = scmp.eq.s32.totalorder %s28, 0
    %p352 = por %p350, %p351
    %p353 = scmp.ne.s32.totalorder %s342, %s345
    %p354 = scmp.eq.s32.totalorder %s33, 4
    %p355 = por %p353, %p354
    %p356 = scmp.ne.s32.totalorder %s345, %s346
    %p357 = scmp.eq.s32.totalorder %s33, 0
    %p358 = por %p356, %p357
    %p359 = scmp.ne.s32.totalorder %s345, %s346
    %p360 = scmp.eq.s32.totalorder %s34, 4
    %p361 = por %p359, %p360
    %p363 = scmp.ne.s32.totalorder %s346, %s362
    %p364 = scmp.eq.s32.totalorder %s34, 0
    %p365 = por %p363, %p364
    %p366 = scmp.le.s32.totalorder 1, %s28
    %p367 = scmp.lt.s32.totalorder %s28, 6
    %p368 = pnand %p366, %p367
    %p369 = pneg %p368
    // Predicated region
    $region9: #{seq2seq_forward.3} parent=5 // pred_check
      _
    $region10: #{seq2seq_forward.3} parent=5 // pred_check_branch
      %371 = sbr.rel (%p368) target = $region12
    $region11: #{seq2seq_forward.3} parent=5 // pred_region
      %s372 = ssub.s32 %s28, 1
      // Predicated region
      $region13: #{seq2seq_forward.3} parent=11 // pred_check
        %p373 = pneg %p75
      $region14: #{seq2seq_forward.3} parent=11 // pred_check_branch
        %375 = sbr.rel (%p373) target = $region16
      $region15: #{seq2seq_forward.3} parent=11 // pred_region
        _
      $region16: #{seq2seq_forward.3} parent=11 // pred_fallthru
        _
      // Predicated region
      $region17: #{seq2seq_forward.3} parent=11 // pred_check
        %p376 = pneg %p96
      $region18: #{seq2seq_forward.3} parent=11 // pred_check_branch
        %378 = sbr.rel (%p376) target = $region20
      $region19: #{seq2seq_forward.3} parent=11 // pred_region
        _
      $region20: #{seq2seq_forward.3} parent=11 // pred_fallthru
        _
      // Predicated region
      $region21: #{seq2seq_forward.3} parent=11 // pred_check
        %p379 = pneg %p117
      $region22: #{seq2seq_forward.3} parent=11 // pred_check_branch
        %381 = sbr.rel (%p379) target = $region24
      $region23: #{seq2seq_forward.3} parent=11 // pred_region
        _
      $region24: #{seq2seq_forward.3} parent=11 // pred_fallthru
        _
      // Predicated region
      $region25: #{seq2seq_forward.3} parent=11 // pred_check
        %p382 = pneg %p138
      $region26: #{seq2seq_forward.3} parent=11 // pred_check_branch
        %384 = sbr.rel (%p382) target = $region28
      $region27: #{seq2seq_forward.3} parent=11 // pred_region
        _
      $region28: #{seq2seq_forward.3} parent=11 // pred_fallthru
        _
      // Predicated region
      $region29: #{seq2seq_forward.3} parent=11 // pred_check
        %p385 = pneg %p159
      $region30: #{seq2seq_forward.3} parent=11 // pred_check_branch
        %387 = sbr.rel (%p385) target = $region32
      $region31: #{seq2seq_forward.3} parent=11 // pred_region
        _
      $region32: #{seq2seq_forward.3} parent=11 // pred_fallthru
        _
      // Predicated region
      $region33: #{seq2seq_forward.3} parent=11 // pred_check
        %p388 = pneg %p180
      $region34: #{seq2seq_forward.3} parent=11 // pred_check_branch
        %390 = sbr.rel (%p388) target = $region36
      $region35: #{seq2seq_forward.3} parent=11 // pred_region
        _
      $region36: #{seq2seq_forward.3} parent=11 // pred_fallthru
        _
      // Predicated region
      $region37: #{seq2seq_forward.3} parent=11 // pred_check
        %p391 = pneg %p201
      $region38: #{seq2seq_forward.3} parent=11 // pred_check_branch
        %393 = sbr.rel (%p391) target = $region40
      $region39: #{seq2seq_forward.3} parent=11 // pred_region
        _
      $region40: #{seq2seq_forward.3} parent=11 // pred_fallthru
        _
      // Predicated region
      $region41: #{seq2seq_forward.3} parent=11 // pred_check
        %p394 = pneg %p222
      $region42: #{seq2seq_forward.3} parent=11 // pred_check_branch
        %396 = sbr.rel (%p394) target = $region44
      $region43: #{seq2seq_forward.3} parent=11 // pred_region
        _
      $region44: #{seq2seq_forward.3} parent=11 // pred_fallthru
        _
      // Predicated region
      $region45: #{seq2seq_forward.3} parent=11 // pred_check
        %p397 = pneg %p243
      $region46: #{seq2seq_forward.3} parent=11 // pred_check_branch
        %399 = sbr.rel (%p397) target = $region48
      $region47: #{seq2seq_forward.3} parent=11 // pred_region
        _
      $region48: #{seq2seq_forward.3} parent=11 // pred_fallthru
        _
      // Predicated region
      $region49: #{seq2seq_forward.3} parent=11 // pred_check
        %p400 = pneg %p264
      $region50: #{seq2seq_forward.3} parent=11 // pred_check_branch
        %402 = sbr.rel (%p400) target = $region52
      $region51: #{seq2seq_forward.3} parent=11 // pred_region
        _
      $region52: #{seq2seq_forward.3} parent=11 // pred_fallthru
        _
      // Predicated region
      $region53: #{seq2seq_forward.3} parent=11 // pred_check
        %p403 = pneg %p285
      $region54: #{seq2seq_forward.3} parent=11 // pred_check_branch
        %405 = sbr.rel (%p403) target = $region56
      $region55: #{seq2seq_forward.3} parent=11 // pred_region
        _
      $region56: #{seq2seq_forward.3} parent=11 // pred_fallthru
        _
      // Predicated region
      $region57: #{seq2seq_forward.3} parent=11 // pred_check
        %p406 = pneg %p306
      $region58: #{seq2seq_forward.3} parent=11 // pred_check_branch
        %408 = sbr.rel (%p406) target = $region60
      $region59: #{seq2seq_forward.3} parent=11 // pred_region
        _
      $region60: #{seq2seq_forward.3} parent=11 // pred_fallthru
        _
    $region12: #{seq2seq_forward.3} parent=5 // pred_fallthru
      _
    %p409 = scmp.lt.s32.totalorder %s28, 5
    // Predicated region
    $region61: #{seq2seq_forward.3} parent=5 // pred_check
      %p410 = pneg %p409
    $region62: #{seq2seq_forward.3} parent=5 // pred_check_branch
      %412 = sbr.rel (%p410) target = $region64
    $region63: #{seq2seq_forward.3} parent=5 // pred_region
      // Predicated region
      $region65: #{seq2seq_forward.3} parent=63 // pred_check
        %p413 = pneg %p48
      $region66: #{seq2seq_forward.3} parent=63 // pred_check_branch
        %415 = sbr.rel (%p413) target = $region68
      $region67: #{seq2seq_forward.3} parent=63 // pred_region
        %p416 = scmp.lt.s32.totalorder %s28, 4
        %s417 = scalar_select %p416, %s28, 4
        %s418 = scalar_lea.vmem %s1, %s417
      $region68: #{seq2seq_forward.3} parent=63 // pred_fallthru
        _
    $region64: #{seq2seq_forward.3} parent=5 // pred_fallthru
      _
    %p419 = scmp.le.s32.totalorder 1, %s28
    %p420 = scmp.lt.s32.totalorder %s28, 6
    %p421 = pnand %p419, %p420
    %p422 = pneg %p421
    // Predicated region
    $region69: #{seq2seq_forward.3} parent=5 // pred_check
      _
    $region70: #{seq2seq_forward.3} parent=5 // pred_check_branch
      %424 = sbr.rel (%p421) target = $region72
    $region71: #{seq2seq_forward.3} parent=5 // pred_region
      %s425 = ssub.s32 %s28, 1
      %p426 = scmp.lt.s32.totalorder %s33, 4
      %s427 = scalar_select %p426, %s33, 4
      %s428 = scalar_lea.vmem %s1, %s427
      %p429 = pneg %p54
      %p430 = pneg %p51
      %p431 = pneg %p75
      %p432 = pneg %p72
      %p433 = pneg %p96
      %p434 = pneg %p93
      %p435 = pneg %p117
      %p436 = pneg %p114
      %p437 = pneg %p138
      %p438 = pneg %p135
      %p439 = pneg %p159
      %p440 = pneg %p156
      %p441 = pneg %p180
      %p442 = pneg %p177
      %p443 = pneg %p201
      %p444 = pneg %p198
      %p445 = pneg %p222
      %p446 = pneg %p219
      %p447 = pneg %p243
      %p448 = pneg %p240
      %p449 = pneg %p264
      %p450 = pneg %p261
      %p451 = pneg %p285
      %p452 = pneg %p282
      %p453 = pneg %p306
      %p454 = pneg %p303
      %p455 = pneg %p332
      %p456 = pneg %p329
      %p457 = scmp.lt.s32.totalorder %s33, 4
      %s458 = scalar_select %p457, %s33, 4
      %s459 = smul.addr %s458, 2
      %s460 = scalar_lea.vmem %s14, %s459
      %p461 = pneg %p358
      %p462 = pneg %p355
      %p463 = scmp.lt.s32.totalorder %s33, 4
      %s464 = scalar_select %p463, %s33, 4
      %s465 = smul.addr %s464, 2
      %s466 = scalar_lea.vmem %s15, %s465
      %p467 = scmp.lt.s32.totalorder %s33, 4
      %s468 = scalar_select %p467, %s33, 4
      %s469 = scalar_lea.vmem %s1, %s468
      %p470 = scmp.lt.s32.totalorder %s33, 4
      %s471 = scalar_select %p470, %s33, 4
      %s472 = smul.addr %s471, 2
      %s473 = scalar_lea.vmem %s14, %s472
      %p474 = scmp.lt.s32.totalorder %s33, 4
      %s475 = scalar_select %p474, %s33, 4
      %s476 = smul.addr %s475, 2
      %s477 = scalar_lea.vmem %s15, %s476
      %p479 = scmp.eq.s32.totalorder %s33, 0
      // Predicated region
      $region73: #{seq2seq_forward.3} parent=71 // pred_check
        %p480 = pneg %p479
      $region74: #{seq2seq_forward.3} parent=71 // pred_check_branch
        %482 = sbr.rel (%p480) target = $region76
      $region75: #{seq2seq_forward.3} parent=71 // pred_region
        %v483 = vld [vmem:[%s12] sm:$0x3]
        %vm484 = vcmask 254976
        %485 = vst.msk [vmem:[#allocation2] sm:$0x3] %vm484, %v483
        %v486 = vld [vmem:[%s13] sm:$0x3]
        %487 = vst.msk [vmem:[#allocation3] sm:$0x3] %vm484, %v486
        %488 = vst.msk [vmem:[#allocation4] sm:$0x3] %vm484, 0.0
        %v489 = vld [vmem:[%s2] sm:$0xf]
        %v490 = vld [vmem:[%s2 + $0x4] sm:$0xf]
        %v491 = vld [vmem:[%s2 + $0x8] sm:$0xf]
        %v492 = vld [vmem:[%s2 + $0xc] sm:$0xf]
        %v493 = vld [vmem:[%s2 + $0x10] sm:$0xf]
        %v494 = vld [vmem:[%s2 + $0x14] sm:$0xf]
        %v495 = vld [vmem:[%s2 + $0x18] sm:$0xf]
        %v496 = vld [vmem:[%s2 + $0x1c] sm:$0xf]
        %v497 = vld [vmem:[%s2 + $0x20] sm:$0xf]
        %v498 = vld [vmem:[%s2 + $0x24] sm:$0xf]
        %v499 = vld [vmem:[%s2 + $0x28] sm:$0xf]
        %v500 = vld [vmem:[%s2 + $0x2c] sm:$0xf]
        %v501 = vld [vmem:[%s2 + $0x30] sm:$0xf]
        %v502 = vld [vmem:[%s2 + $0x34] sm:$0xf]
        %v503 = vld [vmem:[%s2 + $0x38] sm:$0xf]
        %v504 = vld [vmem:[%s2 + $0x3c] sm:$0xf]
        %v505 = vld [vmem:[%s2 + $0x40] sm:$0xf]
        %v506 = vld [vmem:[%s2 + $0x44] sm:$0xf]
        %v507 = vld [vmem:[%s2 + $0x48] sm:$0xf]
        %v508 = vld [vmem:[%s2 + $0x4c] sm:$0xf]
        %v509 = vld [vmem:[%s2 + $0x50] sm:$0xf]
        %v510 = vld [vmem:[%s2 + $0x54] sm:$0xf]
        %v511 = vld [vmem:[%s2 + $0x58] sm:$0xf]
        %v512 = vld [vmem:[%s2 + $0x5c] sm:$0xf]
        %v513 = vld [vmem:[%s2 + $0x60] sm:$0xf]
        %v514 = vld [vmem:[%s2 + $0x64] sm:$0xf]
        %v515 = vld [vmem:[%s2 + $0x68] sm:$0xf]
        %v516 = vld [vmem:[%s2 + $0x6c] sm:$0xf]
        %v517 = vld [vmem:[%s2 + $0x70] sm:$0xf]
        %v518 = vld [vmem:[%s2 + $0x74] sm:$0xf]
        %v519 = vld [vmem:[%s2 + $0x78] sm:$0xf]
        %v520 = vld [vmem:[%s2 + $0x7c] sm:$0xf]
        %v521 = vld [vmem:[%s6] sm:$0xf]
        %v522 = vld [vmem:[%s6 + $0x4] sm:$0xf]
        %v523 = vld [vmem:[%s6 + $0x8] sm:$0xf]
        %v524 = vld [vmem:[%s6 + $0xc] sm:$0xf]
        %v557 = vunpack.c.l.b16 %v489
        %v558 = vunpack.c.l.b16 %v490
        %v559 = vunpack.c.l.b16 %v491
        %v560 = vunpack.c.l.b16 %v492
        %v561 = vunpack.c.l.b16 %v493
        %v562 = vunpack.c.l.b16 %v494
        %v563 = vunpack.c.l.b16 %v495
        %v564 = vunpack.c.l.b16 %v496
        %v565 = vunpack.c.l.b16 %v497
        %v566 = vunpack.c.l.b16 %v498
        %v567 = vunpack.c.l.b16 %v499
        %v568 = vunpack.c.l.b16 %v500
        %v569 = vunpack.c.l.b16 %v501
        %v570 = vunpack.c.l.b16 %v502
        %v571 = vunpack.c.l.b16 %v503
        %v572 = vunpack.c.l.b16 %v504
        %v573 = vunpack.c.l.b16 %v505
        %v574 = vunpack.c.l.b16 %v506
        %v575 = vunpack.c.l.b16 %v507
        %v576 = vunpack.c.l.b16 %v508
        %v577 = vunpack.c.l.b16 %v509
        %v578 = vunpack.c.l.b16 %v510
        %v579 = vunpack.c.l.b16 %v511
        %v580 = vunpack.c.l.b16 %v512
        %v581 = vunpack.c.l.b16 %v513
        %v582 = vunpack.c.l.b16 %v514
        %v583 = vunpack.c.l.b16 %v515
        %v584 = vunpack.c.l.b16 %v516
        %v585 = vunpack.c.l.b16 %v517
        %v586 = vunpack.c.l.b16 %v518
        %v587 = vunpack.c.l.b16 %v519
        %v588 = vunpack.c.l.b16 %v520
        %v589 = vpack.c.b16 %v558, %v557
        %v590 = vpack.c.b16 %v560, %v559
        %v591 = vpack.c.b16 %v562, %v561
        %v592 = vpack.c.b16 %v564, %v563
        %v593 = vpack.c.b16 %v566, %v565
        %v594 = vpack.c.b16 %v568, %v567
        %v595 = vpack.c.b16 %v570, %v569
        %v596 = vpack.c.b16 %v572, %v571
        %v597 = vpack.c.b16 %v574, %v573
        %v598 = vpack.c.b16 %v576, %v575
        %v599 = vpack.c.b16 %v578, %v577
        %v600 = vpack.c.b16 %v580, %v579
        %v601 = vpack.c.b16 %v582, %v581
        %v602 = vpack.c.b16 %v584, %v583
        %v603 = vpack.c.b16 %v586, %v585
        %v604 = vpack.c.b16 %v588, %v587
        %v609 = vunpack.c.l.b16 %v521
        %v610 = vunpack.c.l.b16 %v522
        %v611 = vunpack.c.l.b16 %v523
        %v612 = vunpack.c.l.b16 %v524
        %v613 = vpack.c.b16 %v610, %v609
        %v614 = vpack.c.b16 %v612, %v611
        %vm617 = vcmask 261120
        %v619 = vsel %vm617, %v589, 0
        %v622 = vsel %vm617, %v590, 0
        %v625 = vsel %vm617, %v591, 0
        %v628 = vsel %vm617, %v592, 0
        %v631 = vsel %vm617, %v593, 0
        %v634 = vsel %vm617, %v594, 0
        %v637 = vsel %vm617, %v595, 0
        %v640 = vsel %vm617, %v596, 0
        %v643 = vsel %vm617, %v597, 0
        %v646 = vsel %vm617, %v598, 0
        %v649 = vsel %vm617, %v599, 0
        %v652 = vsel %vm617, %v600, 0
        %v655 = vsel %vm617, %v601, 0
        %v658 = vsel %vm617, %v602, 0
        %v661 = vsel %vm617, %v603, 0
        %v664 = vsel %vm617, %v604, 0
        %666 = vmatprep.subr.bf16.mxu0 0
        %667 = vmatpush1.bf16.msra.mxu0 %v613
        %668 = vmatprep.subr.bf16.mxu0 0
        %669 = vmatpush1.bf16.msra.mxu0 %v614
        %670 = vmatprep.subr.bf16.mxu0 0
        %671 = vmatpush1.bf16.msra.mxu0 0
        %672 = vmatprep.subr.bf16.mxu0 0
        %673 = vmatpush1.bf16.msra.mxu0 0
        %674 = vmatprep.subr.bf16.mxu0 0
        %675 = vmatpush1.bf16.msra.mxu0 0
        %676 = vmatprep.subr.bf16.mxu0 0
        %677 = vmatpush1.bf16.msra.mxu0 0
        %678 = vmatprep.subr.bf16.mxu0 0
        %679 = vmatpush1.bf16.msra.mxu0 0
        %680 = vmatprep.subr.bf16.mxu0 0
        %681 = vmatpush1.bf16.msra.mxu0 0
        %682 = vmatprep.subr.bf16.mxu0 0
        %683 = vmatpush1.bf16.msra.mxu0 0
        %684 = vmatprep.subr.bf16.mxu0 0
        %685 = vmatpush1.bf16.msra.mxu0 0
        %686 = vmatprep.subr.bf16.mxu0 0
        %687 = vmatpush1.bf16.msra.mxu0 0
        %688 = vmatprep.subr.bf16.mxu0 0
        %689 = vmatpush1.bf16.msra.mxu0 0
        %690 = vmatprep.subr.bf16.mxu0 0
        %691 = vmatpush1.bf16.msra.mxu0 0
        %692 = vmatprep.subr.bf16.mxu0 0
        %693 = vmatpush1.bf16.msra.mxu0 0
        %694 = vmatprep.subr.bf16.mxu0 0
        %695 = vmatpush1.bf16.msra.mxu0 0
        %696 = vmatprep.subr.bf16.mxu0 0
        %697 = vmatpush1.bf16.msra.mxu0 0
        %698 = vmatprep.mubr.bf16.mxu0 0
        %699 = vmatmul.mubr.bf16.gmra.mrb[0].mxu0 %v619
        %v700 = vpop.f32.mrb[0].mxu0
        %v701 = vadd.f32 0.0, %v700
        %v702 = vpop.f32.mrb[0].mxu0
        %v703 = vpop.f32.mrb[0].mxu0
        %v704 = vadd.f32 0.0, %v703
        %v705 = vpop.f32.mrb[0].mxu0
        %706 = vmatprep.mubr.bf16.mxu0 0
        %707 = vmatmul.mubr.bf16.gmra.mrb[0].mxu0 %v622
        %v708 = vpop.f32.mrb[0].mxu0
        %v709 = vadd.f32 0.0, %v708
        %v710 = vpop.f32.mrb[0].mxu0
        %v711 = vpop.f32.mrb[0].mxu0
        %v712 = vadd.f32 0.0, %v711
        %v713 = vpop.f32.mrb[0].mxu0
        %714 = vmatprep.mubr.bf16.mxu0 0
        %715 = vmatmul.mubr.bf16.gmra.mrb[0].mxu0 %v625
        %v716 = vpop.f32.mrb[0].mxu0
        %v717 = vadd.f32 0.0, %v716
        %v718 = vpop.f32.mrb[0].mxu0
        %v719 = vpop.f32.mrb[0].mxu0
        %v720 = vadd.f32 0.0, %v719
        %v721 = vpop.f32.mrb[0].mxu0
        %722 = vmatprep.mubr.bf16.mxu0 0
        %723 = vmatmul.mubr.bf16.gmra.mrb[0].mxu0 %v628
        %v724 = vpop.f32.mrb[0].mxu0
        %v725 = vadd.f32 0.0, %v724
        %v726 = vpop.f32.mrb[0].mxu0
        %v727 = vpop.f32.mrb[0].mxu0
        %v728 = vadd.f32 0.0, %v727
        %v729 = vpop.f32.mrb[0].mxu0
        %730 = vmatprep.mubr.bf16.mxu0 0
        %731 = vmatmul.mubr.bf16.gmra.mrb[0].mxu0 %v631
        %v732 = vpop.f32.mrb[0].mxu0
        %v733 = vadd.f32 0.0, %v732
        %v734 = vpop.f32.mrb[0].mxu0
        %v735 = vpop.f32.mrb[0].mxu0
        %v736 = vadd.f32 0.0, %v735
        %v737 = vpop.f32.mrb[0].mxu0
        %738 = vmatprep.mubr.bf16.mxu0 0
        %739 = vmatmul.mubr.bf16.gmra.mrb[0].mxu0 %v634
        %v740 = vpop.f32.mrb[0].mxu0
        %v741 = vadd.f32 0.0, %v740
        %v742 = vpop.f32.mrb[0].mxu0
        %v743 = vpop.f32.mrb[0].mxu0
        %v744 = vadd.f32 0.0, %v743
        %v745 = vpop.f32.mrb[0].mxu0
        %746 = vmatprep.mubr.bf16.mxu0 0
        %747 = vmatmul.mubr.bf16.gmra.mrb[0].mxu0 %v637
        %v748 = vpop.f32.mrb[0].mxu0
        %v749 = vadd.f32 0.0, %v748
        %v750 = vpop.f32.mrb[0].mxu0
        %v751 = vpop.f32.mrb[0].mxu0
        %v752 = vadd.f32 0.0, %v751
        %v753 = vpop.f32.mrb[0].mxu0
        %754 = vmatprep.mubr.bf16.mxu0 0
        %755 = vmatmul.mubr.bf16.gmra.mrb[0].mxu0 %v640
        %v756 = vpop.f32.mrb[0].mxu0
        %v757 = vadd.f32 0.0, %v756
        %v758 = vpop.f32.mrb[0].mxu0
        %v759 = vpop.f32.mrb[0].mxu0
        %v760 = vadd.f32 0.0, %v759
        %v761 = vpop.f32.mrb[0].mxu0
        %762 = vmatprep.mubr.bf16.mxu0 0
        %763 = vmatmul.mubr.bf16.gmra.mrb[0].mxu0 %v643
        %v764 = vpop.f32.mrb[0].mxu0
        %v765 = vadd.f32 0.0, %v764
        %v766 = vpop.f32.mrb[0].mxu0
        %v767 = vpop.f32.mrb[0].mxu0
        %v768 = vadd.f32 0.0, %v767
        %v769 = vpop.f32.mrb[0].mxu0
        %770 = vmatprep.mubr.bf16.mxu0 0
        %771 = vmatmul.mubr.bf16.gmra.mrb[0].mxu0 %v646
        %v772 = vpop.f32.mrb[0].mxu0
        %v773 = vadd.f32 0.0, %v772
        %v774 = vpop.f32.mrb[0].mxu0
        %v775 = vpop.f32.mrb[0].mxu0
        %v776 = vadd.f32 0.0, %v775
        %v777 = vpop.f32.mrb[0].mxu0
        %778 = vmatprep.mubr.bf16.mxu0 0
        %779 = vmatmul.mubr.bf16.gmra.mrb[0].mxu0 %v649
        %v780 = vpop.f32.mrb[0].mxu0
        %v781 = vadd.f32 0.0, %v780
        %v782 = vpop.f32.mrb[0].mxu0
        %v783 = vpop.f32.mrb[0].mxu0
        %v784 = vadd.f32 0.0, %v783
        %v785 = vpop.f32.mrb[0].mxu0
        %786 = vmatprep.mubr.bf16.mxu0 0
        %787 = vmatmul.mubr.bf16.gmra.mrb[0].mxu0 %v652
        %v788 = vpop.f32.mrb[0].mxu0
        %v789 = vadd.f32 0.0, %v788
        %v790 = vpop.f32.mrb[0].mxu0
        %v791 = vpop.f32.mrb[0].mxu0
        %v792 = vadd.f32 0.0, %v791
        %v793 = vpop.f32.mrb[0].mxu0
        %794 = vmatprep.mubr.bf16.mxu0 0
        %795 = vmatmul.mubr.bf16.gmra.mrb[0].mxu0 %v655
        %v796 = vpop.f32.mrb[0].mxu0
        %v797 = vadd.f32 0.0, %v796
        %v798 = vpop.f32.mrb[0].mxu0
        %v799 = vpop.f32.mrb[0].mxu0
        %v800 = vadd.f32 0.0, %v799
        %v801 = vpop.f32.mrb[0].mxu0
        %802 = vmatprep.mubr.bf16.mxu0 0
        %803 = vmatmul.mubr.bf16.gmra.mrb[0].mxu0 %v658
        %v804 = vpop.f32.mrb[0].mxu0
        %v805 = vadd.f32 0.0, %v804
        %v806 = vpop.f32.mrb[0].mxu0
        %v807 = vpop.f32.mrb[0].mxu0
        %v808 = vadd.f32 0.0, %v807
        %v809 = vpop.f32.mrb[0].mxu0
        %810 = vmatprep.mubr.bf16.mxu0 0
        %811 = vmatmul.mubr.bf16.gmra.mrb[0].mxu0 %v661
        %v812 = vpop.f32.mrb[0].mxu0
        %v813 = vadd.f32 0.0, %v812
        %v814 = vpop.f32.mrb[0].mxu0
        %v815 = vpop.f32.mrb[0].mxu0
        %v816 = vadd.f32 0.0, %v815
        %v817 = vpop.f32.mrb[0].mxu0
        %818 = vmatprep.mubr.bf16.mxu0 0
        %819 = vmatmul.mubr.bf16.gmra.mrb[0].mxu0 %v664
        %v820 = vpop.f32.mrb[0].mxu0
        %v821 = vadd.f32 0.0, %v820
        %v822 = vpop.f32.mrb[0].mxu0
        %v823 = vpop.f32.mrb[0].mxu0
        %v824 = vadd.f32 0.0, %v823
        %v825 = vpop.f32.mrb[0].mxu0
        %826 = vdwg.mxu0
        %827 = vst.msk [vmem:[#allocation5] sm:$0xff] %vm617, %v701
        %828 = vst.msk [vmem:[#allocation5 + $0x8] sm:$0xff] %vm617, %v704
        %829 = vst.msk [vmem:[#allocation5 + $0x10] sm:$0xff] %vm617, %v709
        %830 = vst.msk [vmem:[#allocation5 + $0x18] sm:$0xff] %vm617, %v712
        %831 = vst.msk [vmem:[#allocation5 + $0x20] sm:$0xff] %vm617, %v717
        %832 = vst.msk [vmem:[#allocation5 + $0x28] sm:$0xff] %vm617, %v720
        %833 = vst.msk [vmem:[#allocation5 + $0x30] sm:$0xff] %vm617, %v725
        %834 = vst.msk [vmem:[#allocation5 + $0x38] sm:$0xff] %vm617, %v728
        %835 = vst.msk [vmem:[#allocation5 + $0x40] sm:$0xff] %vm617, %v733
        %836 = vst.msk [vmem:[#allocation5 + $0x48] sm:$0xff] %vm617, %v736
        %837 = vst.msk [vmem:[#allocation5 + $0x50] sm:$0xff] %vm617, %v741
        %838 = vst.msk [vmem:[#allocation5 + $0x58] sm:$0xff] %vm617, %v744
        %839 = vst.msk [vmem:[#allocation5 + $0x60] sm:$0xff] %vm617, %v749
        %840 = vst.msk [vmem:[#allocation5 + $0x68] sm:$0xff] %vm617, %v752
        %841 = vst.msk [vmem:[#allocation5 + $0x70] sm:$0xff] %vm617, %v757
        %842 = vst.msk [vmem:[#allocation5 + $0x78] sm:$0xff] %vm617, %v760
        %843 = vst.msk [vmem:[#allocation5 + $0x80] sm:$0xff] %vm617, %v765
        %844 = vst.msk [vmem:[#allocation5 + $0x88] sm:$0xff] %vm617, %v768
        %845 = vst.msk [vmem:[#allocation5 + $0x90] sm:$0xff] %vm617, %v773
        %846 = vst.msk [vmem:[#allocation5 + $0x98] sm:$0xff] %vm617, %v776
        %847 = vst.msk [vmem:[#allocation5 + $0xa0] sm:$0xff] %vm617, %v781
        %848 = vst.msk [vmem:[#allocation5 + $0xa8] sm:$0xff] %vm617, %v784
        %849 = vst.msk [vmem:[#allocation5 + $0xb0] sm:$0xff] %vm617, %v789
        %850 = vst.msk [vmem:[#allocation5 + $0xb8] sm:$0xff] %vm617, %v792
        %851 = vst.msk [vmem:[#allocation5 + $0xc0] sm:$0xff] %vm617, %v797
        %852 = vst.msk [vmem:[#allocation5 + $0xc8] sm:$0xff] %vm617, %v800
        %853 = vst.msk [vmem:[#allocation5 + $0xd0] sm:$0xff] %vm617, %v805
        %854 = vst.msk [vmem:[#allocation5 + $0xd8] sm:$0xff] %vm617, %v808
        %855 = vst.msk [vmem:[#allocation5 + $0xe0] sm:$0xff] %vm617, %v813
        %856 = vst.msk [vmem:[#allocation5 + $0xe8] sm:$0xff] %vm617, %v816
        %857 = vst.msk [vmem:[#allocation5 + $0xf0] sm:$0xff] %vm617, %v821
        %858 = vst.msk [vmem:[#allocation5 + $0xf8] sm:$0xff] %vm617, %v824
      $region76: #{seq2seq_forward.3} parent=71 // pred_fallthru
        _
      %v859 = vld [vmem:[#allocation2] sm:$0x3]
      %v860 = vld [vmem:[#allocation3] sm:$0x3]
      %s861 = sld [smem:[#allocation7 + %s33]]
      %p862 = scmp.gt.s32.totalorder %s861, 0
      %s863 = scalar_select %p862, 1, 0
      %s864 = scvt.s32.f32 %s863
      %v865 = vld [vmem:[%s469] sm:$0x1]
      %v866 = vunpack.c.l.bf16 %v865
      %v867 = vstv %s864
      %v868 = vmul.f32 %v867, %v866
      %s869 = ssub.f32 1.0, %s864
      %v870 = vld [vmem:[#allocation4] sm:$0x3]
      %v871 = vstv %s869
      %v872 = vmul.f32 %v871, %v870
      %v873 = vadd.f32 %v868, %v872
      %v874 = vpack.c.bf16 %v859, %v859
      %v875 = vld [vmem:[%s5] sm:$0xf]
      %v876 = vld [vmem:[%s5 + $0x4] sm:$0xf]
      %v877 = vld [vmem:[%s5 + $0x8] sm:$0xf]
      %v878 = vld [vmem:[%s5 + $0xc] sm:$0xf]
      %v883 = vunpack.c.l.b16 %v875
      %v884 = vunpack.c.l.b16 %v876
      %v885 = vunpack.c.l.b16 %v877
      %v886 = vunpack.c.l.b16 %v878
      %v887 = vpack.c.b16 %v884, %v883
      %v888 = vpack.c.b16 %v886, %v885
      %vm891 = vcmask 261120
      %v893 = vsel %vm891, %v874, 0
      %895 = vmatprep.subr.bf16.mxu0 0
      %896 = vmatpush1.bf16.msra.mxu0 %v887
      %897 = vmatprep.subr.bf16.mxu0 0
      %898 = vmatpush1.bf16.msra.mxu0 %v888
      %899 = vmatprep.subr.bf16.mxu0 0
      %900 = vmatpush1.bf16.msra.mxu0 0
      %901 = vmatprep.subr.bf16.mxu0 0
      %902 = vmatpush1.bf16.msra.mxu0 0
      %903 = vmatprep.subr.bf16.mxu0 0
      %904 = vmatpush1.bf16.msra.mxu0 0
      %905 = vmatprep.subr.bf16.mxu0 0
      %906 = vmatpush1.bf16.msra.mxu0 0
      %907 = vmatprep.subr.bf16.mxu0 0
      %908 = vmatpush1.bf16.msra.mxu0 0
      %909 = vmatprep.subr.bf16.mxu0 0
      %910 = vmatpush1.bf16.msra.mxu0 0
      %911 = vmatprep.subr.bf16.mxu0 0
      %912 = vmatpush1.bf16.msra.mxu0 0
      %913 = vmatprep.subr.bf16.mxu0 0
      %914 = vmatpush1.bf16.msra.mxu0 0
      %915 = vmatprep.subr.bf16.mxu0 0
      %916 = vmatpush1.bf16.msra.mxu0 0
      %917 = vmatprep.subr.bf16.mxu0 0
      %918 = vmatpush1.bf16.msra.mxu0 0
      %919 = vmatprep.subr.bf16.mxu0 0
      %920 = vmatpush1.bf16.msra.mxu0 0
      %921 = vmatprep.subr.bf16.mxu0 0
      %922 = vmatpush1.bf16.msra.mxu0 0
      %923 = vmatprep.subr.bf16.mxu0 0
      %924 = vmatpush1.bf16.msra.mxu0 0
      %925 = vmatprep.subr.bf16.mxu0 0
      %926 = vmatpush1.bf16.msra.mxu0 0
      %927 = vmatprep.mubr.bf16.mxu0 0
      %928 = vmatmul.mubr.bf16.gmra.mrb[0].mxu0 %v893
      %v929 = vpop.f32.mrb[0].mxu0
      %v930 = vadd.f32 0.0, %v929
      %v931 = vpop.f32.mrb[0].mxu0
      %v932 = vpop.f32.mrb[0].mxu0
      %v933 = vpop.f32.mrb[0].mxu0
      %934 = vdwg.mxu0
      %v935 = vld [vmem:[#allocation5] sm:$0xff]
      %v936 = vld [vmem:[#allocation5 + $0x8] sm:$0xff]
      %v937 = vld [vmem:[#allocation5 + $0x10] sm:$0xff]
      %v938 = vld [vmem:[#allocation5 + $0x18] sm:$0xff]
      %v939 = vld [vmem:[#allocation5 + $0x20] sm:$0xff]
      %v940 = vld [vmem:[#allocation5 + $0x28] sm:$0xff]
      %v941 = vld [vmem:[#allocation5 + $0x30] sm:$0xff]
      %v942 = vld [vmem:[#allocation5 + $0x38] sm:$0xff]
      %v943 = vld [vmem:[#allocation5 + $0x40] sm:$0xff]
      %v944 = vld [vmem:[#allocation5 + $0x48] sm:$0xff]
      %v945 = vld [vmem:[#allocation5 + $0x50] sm:$0xff]
      %v946 = vld [vmem:[#allocation5 + $0x58] sm:$0xff]
      %v947 = vld [vmem:[#allocation5 + $0x60] sm:$0xff]
      %v948 = vld [vmem:[#allocation5 + $0x68] sm:$0xff]
      %v949 = vld [vmem:[#allocation5 + $0x70] sm:$0xff]
      %v950 = vld [vmem:[#allocation5 + $0x78] sm:$0xff]
      %v951 = vld [vmem:[#allocation5 + $0x80] sm:$0xff]
      %v952 = vld [vmem:[#allocation5 + $0x88] sm:$0xff]
      %v953 = vld [vmem:[#allocation5 + $0x90] sm:$0xff]
      %v954 = vld [vmem:[#allocation5 + $0x98] sm:$0xff]
      %v955 = vld [vmem:[#allocation5 + $0xa0] sm:$0xff]
      %v956 = vld [vmem:[#allocation5 + $0xa8] sm:$0xff]
      %v957 = vld [vmem:[#allocation5 + $0xb0] sm:$0xff]
      %v958 = vld [vmem:[#allocation5 + $0xb8] sm:$0xff]
      %v959 = vld [vmem:[#allocation5 + $0xc0] sm:$0xff]
      %v960 = vld [vmem:[#allocation5 + $0xc8] sm:$0xff]
      %v961 = vld [vmem:[#allocation5 + $0xd0] sm:$0xff]
      %v962 = vld [vmem:[#allocation5 + $0xd8] sm:$0xff]
      %v963 = vld [vmem:[#allocation5 + $0xe0] sm:$0xff]
      %v964 = vld [vmem:[#allocation5 + $0xe8] sm:$0xff]
      %v965 = vld [vmem:[#allocation5 + $0xf0] sm:$0xff]
      %v966 = vld [vmem:[#allocation5 + $0xf8] sm:$0xff]
      %v969 = vunpack.c.l.s4 1966171168
      %v970 = vunpack.c.0.s8 %v969
      %v971 = vlaneseq
      %v972 = vshrl.u32 %v971, 7
      %v973 = vsub.s32 %v970, %v972
      %v974 = vrot.slane %v930, %v973
      %v975 = vcombine.high %v974, %v974
      %v977 = vunpack.c.l.s4 1966171168
      %v978 = vunpack.c.0.s8 %v977
      %v979 = vlaneseq
      %v980 = vshrl.u32 %v979, 7
      %v981 = vsub.s32 %v978, %v980
      %v982 = vrot.slane %v974, %v981
      %v984 = vunpack.c.l.s4 1966171168
      %v985 = vunpack.c.0.s8 %v984
      %v986 = vlaneseq
      %v987 = vshrl.u32 %v986, 7
      %v988 = vsub.s32 %v985, %v987
      %v989 = vrot.slane %v975, %v988
      %v990 = vlaneseq
      %v991 = vshrl.u32 %v990, 7
      %v992 = vsub.s32 0, %v991
      %v993 = vrot.slane %v982, %v992
      %v994 = vlaneseq
      %v995 = vshrl.u32 %v994, 7
      %v996 = vsub.s32 0, %v995
      %v997 = vrot.slane %v989, %v996
      %v1000 = vadd.f32 %v935, %v993
      %v1001 = vadd.f32 %v936, %v993
      %v1002 = vadd.f32 %v937, %v993
      %v1003 = vadd.f32 %v938, %v993
      %v1004 = vadd.f32 %v939, %v993
      %v1005 = vadd.f32 %v940, %v993
      %v1006 = vadd.f32 %v941, %v993
      %v1007 = vadd.f32 %v942, %v993
      %v1008 = vadd.f32 %v943, %v993
      %v1009 = vadd.f32 %v944, %v993
      %v1010 = vadd.f32 %v945, %v993
      %v1011 = vadd.f32 %v946, %v993
      %v1012 = vadd.f32 %v947, %v993
      %v1013 = vadd.f32 %v948, %v993
      %v1014 = vadd.f32 %v949, %v993
      %v1015 = vadd.f32 %v950, %v993
      %v1016 = vadd.f32 %v951, %v997
      %v1017 = vadd.f32 %v952, %v997
      %v1018 = vadd.f32 %v953, %v997
      %v1019 = vadd.f32 %v954, %v997
      %v1020 = vadd.f32 %v955, %v997
      %v1021 = vadd.f32 %v956, %v997
      %v1022 = vadd.f32 %v957, %v997
      %v1023 = vadd.f32 %v958, %v997
      %v1024 = vadd.f32 %v959, %v997
      %v1025 = vadd.f32 %v960, %v997
      %v1026 = vadd.f32 %v961, %v997
      %v1027 = vadd.f32 %v962, %v997
      %v1028 = vadd.f32 %v963, %v997
      %v1029 = vadd.f32 %v964, %v997
      %v1030 = vadd.f32 %v965, %v997
      %v1031 = vadd.f32 %v966, %v997
      %v1032 = vtanh.pop %v1000
      %v1033 = vtanh.pop %v1001
      %v1034 = vtanh.pop %v1002
      %v1035 = vtanh.pop %v1003
      %v1036 = vtanh.pop %v1004
      %v1037 = vtanh.pop %v1005
      %v1038 = vtanh.pop %v1006
      %v1039 = vtanh.pop %v1007
      %v1040 = vtanh.pop %v1008
      %v1041 = vtanh.pop %v1009
      %v1042 = vtanh.pop %v1010
      %v1043 = vtanh.pop %v1011
      %v1044 = vtanh.pop %v1012
      %v1045 = vtanh.pop %v1013
      %v1046 = vtanh.pop %v1014
      %v1047 = vtanh.pop %v1015
      %v1048 = vtanh.pop %v1016
      %v1049 = vtanh.pop %v1017
      %v1050 = vtanh.pop %v1018
      %v1051 = vtanh.pop %v1019
      %v1052 = vtanh.pop %v1020
      %v1053 = vtanh.pop %v1021
      %v1054 = vtanh.pop %v1022
      %v1055 = vtanh.pop %v1023
      %v1056 = vtanh.pop %v1024
      %v1057 = vtanh.pop %v1025
      %v1058 = vtanh.pop %v1026
      %v1059 = vtanh.pop %v1027
      %v1060 = vtanh.pop %v1028
      %v1061 = vtanh.pop %v1029
      %v1062 = vtanh.pop %v1030
      %v1063 = vtanh.pop %v1031
      %v1064 = vld [vmem:[%s7] sm:$0x1]
      %v1066 = vlaneseq
      %v1067 = vshrl.u32 %v1066, 7
      %v1068 = vsub.s32 0, %v1067
      %v1069 = vrot.slane %v1064, %v1068
      %v1071 = vmul.f32 %v1032, %v1069
      %v1072 = vmul.f32 %v1033, %v1069
      %v1073 = vmul.f32 %v1034, %v1069
      %v1074 = vmul.f32 %v1035, %v1069
      %v1075 = vmul.f32 %v1036, %v1069
      %v1076 = vmul.f32 %v1037, %v1069
      %v1077 = vmul.f32 %v1038, %v1069
      %v1078 = vmul.f32 %v1039, %v1069
      %v1079 = vmul.f32 %v1040, %v1069
      %v1080 = vmul.f32 %v1041, %v1069
      %v1081 = vmul.f32 %v1042, %v1069
      %v1082 = vmul.f32 %v1043, %v1069
      %v1083 = vmul.f32 %v1044, %v1069
      %v1084 = vmul.f32 %v1045, %v1069
      %v1085 = vmul.f32 %v1046, %v1069
      %v1086 = vmul.f32 %v1047, %v1069
      %v1087 = vmul.f32 %v1048, %v1069
      %v1088 = vmul.f32 %v1049, %v1069
      %v1089 = vmul.f32 %v1050, %v1069
      %v1090 = vmul.f32 %v1051, %v1069
      %v1091 = vmul.f32 %v1052, %v1069
      %v1092 = vmul.f32 %v1053, %v1069
      %v1093 = vmul.f32 %v1054, %v1069
      %v1094 = vmul.f32 %v1055, %v1069
      %v1095 = vmul.f32 %v1056, %v1069
      %v1096 = vmul.f32 %v1057, %v1069
      %v1097 = vmul.f32 %v1058, %v1069
      %v1098 = vmul.f32 %v1059, %v1069
      %v1099 = vmul.f32 %v1060, %v1069
      %v1100 = vmul.f32 %v1061, %v1069
      %v1101 = vmul.f32 %v1062, %v1069
      %v1102 = vmul.f32 %v1063, %v1069
      %v1103 = vsel %vm891, %v1071, 0.0
      %1104 = vadd.xlane.f32.xlu0 %v1103
      %v1105 = vpop.xlane.xlu0 %1104
      %v1106 = vsel %vm891, %v1072, 0.0
      %1107 = vadd.xlane.f32.xlu0 %v1106
      %v1108 = vpop.xlane.xlu0 %1107
      %v1109 = vsel %vm891, %v1073, 0.0
      %1110 = vadd.xlane.f32.xlu0 %v1109
      %v1111 = vpop.xlane.xlu0 %1110
      %v1112 = vsel %vm891, %v1074, 0.0
      %1113 = vadd.xlane.f32.xlu0 %v1112
      %v1114 = vpop.xlane.xlu0 %1113
      %v1115 = vsel %vm891, %v1075, 0.0
      %1116 = vadd.xlane.f32.xlu0 %v1115
      %v1117 = vpop.xlane.xlu0 %1116
      %v1118 = vsel %vm891, %v1076, 0.0
      %1119 = vadd.xlane.f32.xlu0 %v1118
      %v1120 = vpop.xlane.xlu0 %1119
      %v1121 = vsel %vm891, %v1077, 0.0
      %1122 = vadd.xlane.f32.xlu0 %v1121
      %v1123 = vpop.xlane.xlu0 %1122
      %v1124 = vsel %vm891, %v1078, 0.0
      %1125 = vadd.xlane.f32.xlu0 %v1124
      %v1126 = vpop.xlane.xlu0 %1125
      %v1127 = vsel %vm891, %v1079, 0.0
      %1128 = vadd.xlane.f32.xlu0 %v1127
      %v1129 = vpop.xlane.xlu0 %1128
      %v1130 = vsel %vm891, %v1080, 0.0
      %1131 = vadd.xlane.f32.xlu0 %v1130
      %v1132 = vpop.xlane.xlu0 %1131
      %v1133 = vsel %vm891, %v1081, 0.0
      %1134 = vadd.xlane.f32.xlu0 %v1133
      %v1135 = vpop.xlane.xlu0 %1134
      %v1136 = vsel %vm891, %v1082, 0.0
      %1137 = vadd.xlane.f32.xlu0 %v1136
      %v1138 = vpop.xlane.xlu0 %1137
      %v1139 = vsel %vm891, %v1083, 0.0
      %1140 = vadd.xlane.f32.xlu0 %v1139
      %v1141 = vpop.xlane.xlu0 %1140
      %v1142 = vsel %vm891, %v1084, 0.0
      %1143 = vadd.xlane.f32.xlu0 %v1142
      %v1144 = vpop.xlane.xlu0 %1143
      %v1145 = vsel %vm891, %v1085, 0.0
      %1146 = vadd.xlane.f32.xlu0 %v1145
      %v1147 = vpop.xlane.xlu0 %1146
      %v1148 = vsel %vm891, %v1086, 0.0
      %1149 = vadd.xlane.f32.xlu0 %v1148
      %v1150 = vpop.xlane.xlu0 %1149
      %v1151 = vsel %vm891, %v1087, 0.0
      %1152 = vadd.xlane.f32.xlu0 %v1151
      %v1153 = vpop.xlane.xlu0 %1152
      %v1154 = vsel %vm891, %v1088, 0.0
      %1155 = vadd.xlane.f32.xlu0 %v1154
      %v1156 = vpop.xlane.xlu0 %1155
      %v1157 = vsel %vm891, %v1089, 0.0
      %1158 = vadd.xlane.f32.xlu0 %v1157
      %v1159 = vpop.xlane.xlu0 %1158
      %v1160 = vsel %vm891, %v1090, 0.0
      %1161 = vadd.xlane.f32.xlu0 %v1160
      %v1162 = vpop.xlane.xlu0 %1161
      %v1163 = vsel %vm891, %v1091, 0.0
      %1164 = vadd.xlane.f32.xlu0 %v1163
      %v1165 = vpop.xlane.xlu0 %1164
      %v1166 = vsel %vm891, %v1092, 0.0
      %1167 = vadd.xlane.f32.xlu0 %v1166
      %v1168 = vpop.xlane.xlu0 %1167
      %v1169 = vsel %vm891, %v1093, 0.0
      %1170 = vadd.xlane.f32.xlu0 %v1169
      %v1171 = vpop.xlane.xlu0 %1170
      %v1172 = vsel %vm891, %v1094, 0.0
      %1173 = vadd.xlane.f32.xlu0 %v1172
      %v1174 = vpop.xlane.xlu0 %1173
      %v1175 = vsel %vm891, %v1095, 0.0
      %1176 = vadd.xlane.f32.xlu0 %v1175
      %v1177 = vpop.xlane.xlu0 %1176
      %v1178 = vsel %vm891, %v1096, 0.0
      %1179 = vadd.xlane.f32.xlu0 %v1178
      %v1180 = vpop.xlane.xlu0 %1179
      %v1181 = vsel %vm891, %v1097, 0.0
      %1182 = vadd.xlane.f32.xlu0 %v1181
      %v1183 = vpop.xlane.xlu0 %1182
      %v1184 = vsel %vm891, %v1098, 0.0
      %1185 = vadd.xlane.f32.xlu0 %v1184
      %v1186 = vpop.xlane.xlu0 %1185
      %v1187 = vsel %vm891, %v1099, 0.0
      %1188 = vadd.xlane.f32.xlu0 %v1187
      %v1189 = vpop.xlane.xlu0 %1188
      %v1190 = vsel %vm891, %v1100, 0.0
      %1191 = vadd.xlane.f32.xlu0 %v1190
      %v1192 = vpop.xlane.xlu0 %1191
      %v1193 = vsel %vm891, %v1101, 0.0
      %1194 = vadd.xlane.f32.xlu0 %v1193
      %v1195 = vpop.xlane.xlu0 %1194
      %v1196 = vsel %vm891, %v1102, 0.0
      %1197 = vadd.xlane.f32.xlu0 %v1196
      %v1198 = vpop.xlane.xlu0 %1197
      %v1199 = vld [vmem:[%s3] sm:$0x3]
      %vm1200 = vcmp.gt.f32.partialorder %v1199, 0.5
      %v1233 = vlaneseq
      %v1234 = vand.u32 %v1233, 127
      %v1235 = vlaneseq
      %v1236 = vshrl.u32 %v1235, 7
      %v1237 = vsub.s32 %v1234, %v1236
      %v1238 = vrot.slane %v1105, %v1237
      %v1239 = vadd.s32 %v1234, 4294967288
      %v1240 = vlaneseq
      %v1241 = vshrl.u32 %v1240, 7
      %v1242 = vsub.s32 %v1239, %v1241
      %v1243 = vrot.slane %v1108, %v1242
      %vm1244 = vcmask 130112
      %v1245 = vsel %vm1244, %v1243, %v1238
      %v1246 = vadd.s32 %v1234, 4294967280
      %v1247 = vlaneseq
      %v1248 = vshrl.u32 %v1247, 7
      %v1249 = vsub.s32 %v1246, %v1248
      %v1250 = vrot.slane %v1111, %v1249
      %vm1251 = vcmask 195712
      %v1252 = vsel %vm1251, %v1250, %v1245
      %v1253 = vadd.s32 %v1234, 4294967272
      %v1254 = vlaneseq
      %v1255 = vshrl.u32 %v1254, 7
      %v1256 = vsub.s32 %v1253, %v1255
      %v1257 = vrot.slane %v1114, %v1256
      %vm1258 = vcmask 261312
      %v1259 = vsel %vm1258, %v1257, %v1252
      %v1260 = vadd.s32 %v1234, 4294967264
      %v1261 = vlaneseq
      %v1262 = vshrl.u32 %v1261, 7
      %v1263 = vsub.s32 %v1260, %v1262
      %v1264 = vrot.slane %v1117, %v1263
      %vm1265 = vcmask 326912
      %v1266 = vsel %vm1265, %v1264, %v1259
      %v1267 = vadd.s32 %v1234, 4294967256
      %v1268 = vlaneseq
      %v1269 = vshrl.u32 %v1268, 7
      %v1270 = vsub.s32 %v1267, %v1269
      %v1271 = vrot.slane %v1120, %v1270
      %vm1272 = vcmask 392512
      %v1273 = vsel %vm1272, %v1271, %v1266
      %v1274 = vadd.s32 %v1234, 4294967248
      %v1275 = vlaneseq
      %v1276 = vshrl.u32 %v1275, 7
      %v1277 = vsub.s32 %v1274, %v1276
      %v1278 = vrot.slane %v1123, %v1277
      %vm1279 = vcmask 458112
      %v1280 = vsel %vm1279, %v1278, %v1273
      %v1281 = vadd.s32 %v1234, 4294967240
      %v1282 = vlaneseq
      %v1283 = vshrl.u32 %v1282, 7
      %v1284 = vsub.s32 %v1281, %v1283
      %v1285 = vrot.slane %v1126, %v1284
      %vm1286 = vcmask 523712
      %v1287 = vsel %vm1286, %v1285, %v1280
      %v1288 = vadd.s32 %v1234, 4294967232
      %v1289 = vlaneseq
      %v1290 = vshrl.u32 %v1289, 7
      %v1291 = vsub.s32 %v1288, %v1290
      %v1292 = vrot.slane %v1129, %v1291
      %vm1293 = vcmask 589312
      %v1294 = vsel %vm1293, %v1292, %v1287
      %v1295 = vadd.s32 %v1234, 4294967224
      %v1296 = vlaneseq
      %v1297 = vshrl.u32 %v1296, 7
      %v1298 = vsub.s32 %v1295, %v1297
      %v1299 = vrot.slane %v1132, %v1298
      %vm1300 = vcmask 654912
      %v1301 = vsel %vm1300, %v1299, %v1294
      %v1302 = vadd.s32 %v1234, 4294967216
      %v1303 = vlaneseq
      %v1304 = vshrl.u32 %v1303, 7
      %v1305 = vsub.s32 %v1302, %v1304
      %v1306 = vrot.slane %v1135, %v1305
      %vm1307 = vcmask 720512
      %v1308 = vsel %vm1307, %v1306, %v1301
      %v1309 = vadd.s32 %v1234, 4294967208
      %v1310 = vlaneseq
      %v1311 = vshrl.u32 %v1310, 7
      %v1312 = vsub.s32 %v1309, %v1311
      %v1313 = vrot.slane %v1138, %v1312
      %vm1314 = vcmask 786112
      %v1315 = vsel %vm1314, %v1313, %v1308
      %v1316 = vadd.s32 %v1234, 4294967200
      %v1317 = vlaneseq
      %v1318 = vshrl.u32 %v1317, 7
      %v1319 = vsub.s32 %v1316, %v1318
      %v1320 = vrot.slane %v1141, %v1319
      %vm1321 = vcmask 851712
      %v1322 = vsel %vm1321, %v1320, %v1315
      %v1323 = vadd.s32 %v1234, 4294967192
      %v1324 = vlaneseq
      %v1325 = vshrl.u32 %v1324, 7
      %v1326 = vsub.s32 %v1323, %v1325
      %v1327 = vrot.slane %v1144, %v1326
      %vm1328 = vcmask 917312
      %v1329 = vsel %vm1328, %v1327, %v1322
      %v1330 = vadd.s32 %v1234, 4294967184
      %v1331 = vlaneseq
      %v1332 = vshrl.u32 %v1331, 7
      %v1333 = vsub.s32 %v1330, %v1332
      %v1334 = vrot.slane %v1147, %v1333
      %vm1335 = vcmask 982912
      %v1336 = vsel %vm1335, %v1334, %v1329
      %v1337 = vadd.s32 %v1234, 4294967176
      %v1338 = vlaneseq
      %v1339 = vshrl.u32 %v1338, 7
      %v1340 = vsub.s32 %v1337, %v1339
      %v1341 = vrot.slane %v1150, %v1340
      %vm1342 = vcmask 1048512
      %v1343 = vsel %vm1342, %v1341, %v1336
      %v1344 = vlaneseq
      %v1345 = vshrl.u32 %v1344, 7
      %v1346 = vsub.s32 %v1234, %v1345
      %v1347 = vrot.slane %v1153, %v1346
      %v1348 = vlaneseq
      %v1349 = vshrl.u32 %v1348, 7
      %v1350 = vsub.s32 %v1239, %v1349
      %v1351 = vrot.slane %v1156, %v1350
      %v1352 = vsel %vm1244, %v1351, %v1347
      %v1353 = vlaneseq
      %v1354 = vshrl.u32 %v1353, 7
      %v1355 = vsub.s32 %v1246, %v1354
      %v1356 = vrot.slane %v1159, %v1355
      %v1357 = vsel %vm1251, %v1356, %v1352
      %v1358 = vlaneseq
      %v1359 = vshrl.u32 %v1358, 7
      %v1360 = vsub.s32 %v1253, %v1359
      %v1361 = vrot.slane %v1162, %v1360
      %v1362 = vsel %vm1258, %v1361, %v1357
      %v1363 = vlaneseq
      %v1364 = vshrl.u32 %v1363, 7
      %v1365 = vsub.s32 %v1260, %v1364
      %v1366 = vrot.slane %v1165, %v1365
      %v1367 = vsel %vm1265, %v1366, %v1362
      %v1368 = vlaneseq
      %v1369 = vshrl.u32 %v1368, 7
      %v1370 = vsub.s32 %v1267, %v1369
      %v1371 = vrot.slane %v1168, %v1370
      %v1372 = vsel %vm1272, %v1371, %v1367
      %v1373 = vlaneseq
      %v1374 = vshrl.u32 %v1373, 7
      %v1375 = vsub.s32 %v1274, %v1374
      %v1376 = vrot.slane %v1171, %v1375
      %v1377 = vsel %vm1279, %v1376, %v1372
      %v1378 = vlaneseq
      %v1379 = vshrl.u32 %v1378, 7
      %v1380 = vsub.s32 %v1281, %v1379
      %v1381 = vrot.slane %v1174, %v1380
      %v1382 = vsel %vm1286, %v1381, %v1377
      %v1383 = vlaneseq
      %v1384 = vshrl.u32 %v1383, 7
      %v1385 = vsub.s32 %v1288, %v1384
      %v1386 = vrot.slane %v1177, %v1385
      %v1387 = vsel %vm1293, %v1386, %v1382
      %v1388 = vlaneseq
      %v1389 = vshrl.u32 %v1388, 7
      %v1390 = vsub.s32 %v1295, %v1389
      %v1391 = vrot.slane %v1180, %v1390
      %v1392 = vsel %vm1300, %v1391, %v1387
      %v1393 = vlaneseq
      %v1394 = vshrl.u32 %v1393, 7
      %v1395 = vsub.s32 %v1302, %v1394
      %v1396 = vrot.slane %v1183, %v1395
      %v1397 = vsel %vm1307, %v1396, %v1392
      %v1398 = vlaneseq
      %v1399 = vshrl.u32 %v1398, 7
      %v1400 = vsub.s32 %v1309, %v1399
      %v1401 = vrot.slane %v1186, %v1400
      %v1402 = vsel %vm1314, %v1401, %v1397
      %v1403 = vlaneseq
      %v1404 = vshrl.u32 %v1403, 7
      %v1405 = vsub.s32 %v1316, %v1404
      %v1406 = vrot.slane %v1189, %v1405
      %v1407 = vsel %vm1321, %v1406, %v1402
      %v1408 = vlaneseq
      %v1409 = vshrl.u32 %v1408, 7
      %v1410 = vsub.s32 %v1323, %v1409
      %v1411 = vrot.slane %v1192, %v1410
      %v1412 = vsel %vm1328, %v1411, %v1407
      %v1413 = vlaneseq
      %v1414 = vshrl.u32 %v1413, 7
      %v1415 = vsub.s32 %v1330, %v1414
      %v1416 = vrot.slane %v1195, %v1415
      %v1417 = vsel %vm1335, %v1416, %v1412
      %v1418 = vlaneseq
      %v1419 = vshrl.u32 %v1418, 7
      %v1420 = vsub.s32 %v1337, %v1419
      %v1421 = vrot.slane %v1198, %v1420
      %v1422 = vsel %vm1342, %v1421, %v1417
      %vm1423 = vcmask 1041409
      %v1424 = vsel %vm1423, %v1422, %v1343
      %v1426 = vsel %vm1200, %v1424, -1e+10
      %vm1427 = vcmask 1041408
      %v1428 = vsel %vm1427, %v1426, -inf
      %1429 = vmax.xlane.f32.xlu0 %v1428
      %v1430 = vpop.xlane.xlu0 %1429
      %v1431 = vsub.f32 %v1426, %v1430
      %v1432 = vmul.f32 %v1431, 1.442695
      %v1433 = vpow.pop %v1432
      %v1434 = vsel %vm1427, %v1433, 0.0
      %1435 = vadd.xlane.f32.xlu0 %v1434
      %v1436 = vpop.xlane.xlu0 %1435
      %v1437 = vrcp.pop %v1436
      %v1438 = vmul.f32 %v1436, %v1437
      %v1439 = vsub.f32 2.0, %v1438
      %v1440 = vmul.f32 %v1437, %v1439
      %v1441 = vmul.f32 %v1436, %v1440
      %v1442 = vsub.f32 2.0, %v1441
      %v1443 = vmul.f32 %v1440, %v1442
      %v1444 = vmul.f32 %v1433, %v1443
      %v1445 = vlaneseq
      %v1446 = vshrl.u32 %v1445, 7
      %v1447 = vsub.s32 0, %v1446
      %v1448 = vrot.slane %v1444, %v1447
      %1450 = vbcast.lane.b32.xlu0 %v1448, 256
      %v1451 = vpop.permute.xlu0 %1450
      %s1453 = sor.u32 256, 8
      %1454 = vbcast.lane.b32.xlu0 %v1448, %s1453
      %v1455 = vpop.permute.xlu0 %1454
      %s1457 = sor.u32 256, 16
      %1458 = vbcast.lane.b32.xlu0 %v1448, %s1457
      %v1459 = vpop.permute.xlu0 %1458
      %s1461 = sor.u32 256, 24
      %1462 = vbcast.lane.b32.xlu0 %v1448, %s1461
      %v1463 = vpop.permute.xlu0 %1462
      %s1465 = sor.u32 256, 32
      %1466 = vbcast.lane.b32.xlu0 %v1448, %s1465
      %v1467 = vpop.permute.xlu0 %1466
      %s1469 = sor.u32 256, 40
      %1470 = vbcast.lane.b32.xlu0 %v1448, %s1469
      %v1471 = vpop.permute.xlu0 %1470
      %s1473 = sor.u32 256, 48
      %1474 = vbcast.lane.b32.xlu0 %v1448, %s1473
      %v1475 = vpop.permute.xlu0 %1474
      %s1477 = sor.u32 256, 56
      %1478 = vbcast.lane.b32.xlu0 %v1448, %s1477
      %v1479 = vpop.permute.xlu0 %1478
      %s1481 = sor.u32 256, 64
      %1482 = vbcast.lane.b32.xlu0 %v1448, %s1481
      %v1483 = vpop.permute.xlu0 %1482
      %s1485 = sor.u32 256, 72
      %1486 = vbcast.lane.b32.xlu0 %v1448, %s1485
      %v1487 = vpop.permute.xlu0 %1486
      %s1489 = sor.u32 256, 80
      %1490 = vbcast.lane.b32.xlu0 %v1448, %s1489
      %v1491 = vpop.permute.xlu0 %1490
      %s1493 = sor.u32 256, 88
      %1494 = vbcast.lane.b32.xlu0 %v1448, %s1493
      %v1495 = vpop.permute.xlu0 %1494
      %s1497 = sor.u32 256, 96
      %1498 = vbcast.lane.b32.xlu0 %v1448, %s1497
      %v1499 = vpop.permute.xlu0 %1498
      %s1501 = sor.u32 256, 104
      %1502 = vbcast.lane.b32.xlu0 %v1448, %s1501
      %v1503 = vpop.permute.xlu0 %1502
      %s1505 = sor.u32 256, 112
      %1506 = vbcast.lane.b32.xlu0 %v1448, %s1505
      %v1507 = vpop.permute.xlu0 %1506
      %s1509 = sor.u32 256, 120
      %1510 = vbcast.lane.b32.xlu0 %v1448, %s1509
      %v1511 = vpop.permute.xlu0 %1510
      %v1512 = vlaneseq
      %v1513 = vshrl.u32 %v1512, 7
      %v1514 = vsub.s32 1, %v1513
      %v1515 = vrot.slane %v1444, %v1514
      %1517 = vbcast.lane.b32.xlu0 %v1515, 256
      %v1518 = vpop.permute.xlu0 %1517
      %s1520 = sor.u32 256, 8
      %1521 = vbcast.lane.b32.xlu0 %v1515, %s1520
      %v1522 = vpop.permute.xlu0 %1521
      %s1524 = sor.u32 256, 16
      %1525 = vbcast.lane.b32.xlu0 %v1515, %s1524
      %v1526 = vpop.permute.xlu0 %1525
      %s1528 = sor.u32 256, 24
      %1529 = vbcast.lane.b32.xlu0 %v1515, %s1528
      %v1530 = vpop.permute.xlu0 %1529
      %s1532 = sor.u32 256, 32
      %1533 = vbcast.lane.b32.xlu0 %v1515, %s1532
      %v1534 = vpop.permute.xlu0 %1533
      %s1536 = sor.u32 256, 40
      %1537 = vbcast.lane.b32.xlu0 %v1515, %s1536
      %v1538 = vpop.permute.xlu0 %1537
      %s1540 = sor.u32 256, 48
      %1541 = vbcast.lane.b32.xlu0 %v1515, %s1540
      %v1542 = vpop.permute.xlu0 %1541
      %s1544 = sor.u32 256, 56
      %1545 = vbcast.lane.b32.xlu0 %v1515, %s1544
      %v1546 = vpop.permute.xlu0 %1545
      %s1548 = sor.u32 256, 64
      %1549 = vbcast.lane.b32.xlu0 %v1515, %s1548
      %v1550 = vpop.permute.xlu0 %1549
      %s1552 = sor.u32 256, 72
      %1553 = vbcast.lane.b32.xlu0 %v1515, %s1552
      %v1554 = vpop.permute.xlu0 %1553
      %s1556 = sor.u32 256, 80
      %1557 = vbcast.lane.b32.xlu0 %v1515, %s1556
      %v1558 = vpop.permute.xlu0 %1557
      %s1560 = sor.u32 256, 88
      %1561 = vbcast.lane.b32.xlu0 %v1515, %s1560
      %v1562 = vpop.permute.xlu0 %1561
      %s1564 = sor.u32 256, 96
      %1565 = vbcast.lane.b32.xlu0 %v1515, %s1564
      %v1566 = vpop.permute.xlu0 %1565
      %s1568 = sor.u32 256, 104
      %1569 = vbcast.lane.b32.xlu0 %v1515, %s1568
      %v1570 = vpop.permute.xlu0 %1569
      %s1572 = sor.u32 256, 112
      %1573 = vbcast.lane.b32.xlu0 %v1515, %s1572
      %v1574 = vpop.permute.xlu0 %1573
      %s1576 = sor.u32 256, 120
      %1577 = vbcast.lane.b32.xlu0 %v1515, %s1576
      %v1578 = vpop.permute.xlu0 %1577
      %v1579 = vld [vmem:[%s2] sm:$0xf]
      %v1580 = vld [vmem:[%s2 + $0x4] sm:$0xf]
      %v1581 = vld [vmem:[%s2 + $0x8] sm:$0xf]
      %v1582 = vld [vmem:[%s2 + $0xc] sm:$0xf]
      %v1583 = vld [vmem:[%s2 + $0x10] sm:$0xf]
      %v1584 = vld [vmem:[%s2 + $0x14] sm:$0xf]
      %v1585 = vld [vmem:[%s2 + $0x18] sm:$0xf]
      %v1586 = vld [vmem:[%s2 + $0x1c] sm:$0xf]
      %v1587 = vld [vmem:[%s2 + $0x20] sm:$0xf]
      %v1588 = vld [vmem:[%s2 + $0x24] sm:$0xf]
      %v1589 = vld [vmem:[%s2 + $0x28] sm:$0xf]
      %v1590 = vld [vmem:[%s2 + $0x2c] sm:$0xf]
      %v1591 = vld [vmem:[%s2 + $0x30] sm:$0xf]
      %v1592 = vld [vmem:[%s2 + $0x34] sm:$0xf]
      %v1593 = vld [vmem:[%s2 + $0x38] sm:$0xf]
      %v1594 = vld [vmem:[%s2 + $0x3c] sm:$0xf]
      %v1595 = vld [vmem:[%s2 + $0x40] sm:$0xf]
      %v1596 = vld [vmem:[%s2 + $0x44] sm:$0xf]
      %v1597 = vld [vmem:[%s2 + $0x48] sm:$0xf]
      %v1598 = vld [vmem:[%s2 + $0x4c] sm:$0xf]
      %v1599 = vld [vmem:[%s2 + $0x50] sm:$0xf]
      %v1600 = vld [vmem:[%s2 + $0x54] sm:$0xf]
      %v1601 = vld [vmem:[%s2 + $0x58] sm:$0xf]
      %v1602 = vld [vmem:[%s2 + $0x5c] sm:$0xf]
      %v1603 = vld [vmem:[%s2 + $0x60] sm:$0xf]
      %v1604 = vld [vmem:[%s2 + $0x64] sm:$0xf]
      %v1605 = vld [vmem:[%s2 + $0x68] sm:$0xf]
      %v1606 = vld [vmem:[%s2 + $0x6c] sm:$0xf]
      %v1607 = vld [vmem:[%s2 + $0x70] sm:$0xf]
      %v1608 = vld [vmem:[%s2 + $0x74] sm:$0xf]
      %v1609 = vld [vmem:[%s2 + $0x78] sm:$0xf]
      %v1610 = vld [vmem:[%s2 + $0x7c] sm:$0xf]
      %v1611 = vunpack.c.l.bf16 %v1579
      %v1612 = vunpack.c.l.bf16 %v1580
      %v1613 = vunpack.c.l.bf16 %v1581
      %v1614 = vunpack.c.l.bf16 %v1582
      %v1615 = vunpack.c.l.bf16 %v1583
      %v1616 = vunpack.c.l.bf16 %v1584
      %v1617 = vunpack.c.l.bf16 %v1585
      %v1618 = vunpack.c.l.bf16 %v1586
      %v1619 = vunpack.c.l.bf16 %v1587
      %v1620 = vunpack.c.l.bf16 %v1588
      %v1621 = vunpack.c.l.bf16 %v1589
      %v1622 = vunpack.c.l.bf16 %v1590
      %v1623 = vunpack.c.l.bf16 %v1591
      %v1624 = vunpack.c.l.bf16 %v1592
      %v1625 = vunpack.c.l.bf16 %v1593
      %v1626 = vunpack.c.l.bf16 %v1594
      %v1627 = vunpack.c.l.bf16 %v1595
      %v1628 = vunpack.c.l.bf16 %v1596
      %v1629 = vunpack.c.l.bf16 %v1597
      %v1630 = vunpack.c.l.bf16 %v1598
      %v1631 = vunpack.c.l.bf16 %v1599
      %v1632 = vunpack.c.l.bf16 %v1600
      %v1633 = vunpack.c.l.bf16 %v1601
      %v1634 = vunpack.c.l.bf16 %v1602
      %v1635 = vunpack.c.l.bf16 %v1603
      %v1636 = vunpack.c.l.bf16 %v1604
      %v1637 = vunpack.c.l.bf16 %v1605
      %v1638 = vunpack.c.l.bf16 %v1606
      %v1639 = vunpack.c.l.bf16 %v1607
      %v1640 = vunpack.c.l.bf16 %v1608
      %v1641 = vunpack.c.l.bf16 %v1609
      %v1642 = vunpack.c.l.bf16 %v1610
      %v1643 = vmul.f32 %v1451, %v1611
      %v1644 = vmul.f32 %v1455, %v1612
      %v1645 = vmul.f32 %v1459, %v1613
      %v1646 = vmul.f32 %v1463, %v1614
      %v1647 = vmul.f32 %v1467, %v1615
      %v1648 = vmul.f32 %v1471, %v1616
      %v1649 = vmul.f32 %v1475, %v1617
      %v1650 = vmul.f32 %v1479, %v1618
      %v1651 = vmul.f32 %v1483, %v1619
      %v1652 = vmul.f32 %v1487, %v1620
      %v1653 = vmul.f32 %v1491, %v1621
      %v1654 = vmul.f32 %v1495, %v1622
      %v1655 = vmul.f32 %v1499, %v1623
      %v1656 = vmul.f32 %v1503, %v1624
      %v1657 = vmul.f32 %v1507, %v1625
      %v1658 = vmul.f32 %v1511, %v1626
      %v1659 = vmul.f32 %v1518, %v1627
      %v1660 = vmul.f32 %v1522, %v1628
      %v1661 = vmul.f32 %v1526, %v1629
      %v1662 = vmul.f32 %v1530, %v1630
      %v1663 = vmul.f32 %v1534, %v1631
      %v1664 = vmul.f32 %v1538, %v1632
      %v1665 = vmul.f32 %v1542, %v1633
      %v1666 = vmul.f32 %v1546, %v1634
      %v1667 = vmul.f32 %v1550, %v1635
      %v1668 = vmul.f32 %v1554, %v1636
      %v1669 = vmul.f32 %v1558, %v1637
      %v1670 = vmul.f32 %v1562, %v1638
      %v1671 = vmul.f32 %v1566, %v1639
      %v1672 = vmul.f32 %v1570, %v1640
      %v1673 = vmul.f32 %v1574, %v1641
      %v1674 = vmul.f32 %v1578, %v1642
      %v1675 = vsel %vm891, %v1643, 0.0
      %v1676 = vsel %vm891, %v1644, 0.0
      %v1677 = vadd.f32 %v1675, %v1676
      %v1678 = vsel %vm891, %v1645, 0.0
      %v1679 = vadd.f32 %v1677, %v1678
      %v1680 = vsel %vm891, %v1646, 0.0
      %v1681 = vadd.f32 %v1679, %v1680
      %v1682 = vsel %vm891, %v1647, 0.0
      %v1683 = vadd.f32 %v1681, %v1682
      %v1684 = vsel %vm891, %v1648, 0.0
      %v1685 = vadd.f32 %v1683, %v1684
      %v1686 = vsel %vm891, %v1649, 0.0
      %v1687 = vadd.f32 %v1685, %v1686
      %v1688 = vsel %vm891, %v1650, 0.0
      %v1689 = vadd.f32 %v1687, %v1688
      %v1690 = vsel %vm891, %v1651, 0.0
      %v1691 = vadd.f32 %v1689, %v1690
      %v1692 = vsel %vm891, %v1652, 0.0
      %v1693 = vadd.f32 %v1691, %v1692
      %v1694 = vsel %vm891, %v1653, 0.0
      %v1695 = vadd.f32 %v1693, %v1694
      %v1696 = vsel %vm891, %v1654, 0.0
      %v1697 = vadd.f32 %v1695, %v1696
      %v1698 = vsel %vm891, %v1655, 0.0
      %v1699 = vadd.f32 %v1697, %v1698
      %v1700 = vsel %vm891, %v1656, 0.0
      %v1701 = vadd.f32 %v1699, %v1700
      %v1702 = vsel %vm891, %v1657, 0.0
      %v1703 = vadd.f32 %v1701, %v1702
      %v1704 = vsel %vm891, %v1658, 0.0
      %v1705 = vadd.f32 %v1703, %v1704
      %v1706 = vrot.slane %v1705, 4
      %v1707 = vadd.f32 %v1705, %v1706
      %v1708 = vrot.slane %v1707, 2
      %v1709 = vadd.f32 %v1707, %v1708
      %v1710 = vrot.slane %v1709, 1
      %v1711 = vadd.f32 %v1709, %v1710
      %v1712 = vsel %vm891, %v1659, 0.0
      %v1713 = vsel %vm891, %v1660, 0.0
      %v1714 = vadd.f32 %v1712, %v1713
      %v1715 = vsel %vm891, %v1661, 0.0
      %v1716 = vadd.f32 %v1714, %v1715
      %v1717 = vsel %vm891, %v1662, 0.0
      %v1718 = vadd.f32 %v1716, %v1717
      %v1719 = vsel %vm891, %v1663, 0.0
      %v1720 = vadd.f32 %v1718, %v1719
      %v1721 = vsel %vm891, %v1664, 0.0
      %v1722 = vadd.f32 %v1720, %v1721
      %v1723 = vsel %vm891, %v1665, 0.0
      %v1724 = vadd.f32 %v1722, %v1723
      %v1725 = vsel %vm891, %v1666, 0.0
      %v1726 = vadd.f32 %v1724, %v1725
      %v1727 = vsel %vm891, %v1667, 0.0
      %v1728 = vadd.f32 %v1726, %v1727
      %v1729 = vsel %vm891, %v1668, 0.0
      %v1730 = vadd.f32 %v1728, %v1729
      %v1731 = vsel %vm891, %v1669, 0.0
      %v1732 = vadd.f32 %v1730, %v1731
      %v1733 = vsel %vm891, %v1670, 0.0
      %v1734 = vadd.f32 %v1732, %v1733
      %v1735 = vsel %vm891, %v1671, 0.0
      %v1736 = vadd.f32 %v1734, %v1735
      %v1737 = vsel %vm891, %v1672, 0.0
      %v1738 = vadd.f32 %v1736, %v1737
      %v1739 = vsel %vm891, %v1673, 0.0
      %v1740 = vadd.f32 %v1738, %v1739
      %v1741 = vsel %vm891, %v1674, 0.0
      %v1742 = vadd.f32 %v1740, %v1741
      %v1743 = vrot.slane %v1742, 4
      %v1744 = vadd.f32 %v1742, %v1743
      %v1745 = vrot.slane %v1744, 2
      %v1746 = vadd.f32 %v1744, %v1745
      %v1747 = vrot.slane %v1746, 1
      %v1748 = vadd.f32 %v1746, %v1747
      %v1751 = vsel %vm1423, %v1748, %v1711
      %1752 = vrot.lane.b32.xlu0 %v1751, 32
      %v1753 = vpop.permute.xlu0 %1752
      %1756 = vrot.lane.b32.xlu0 %v859, 64
      %v1757 = vpop.permute.xlu0 %1756
      %v1759 = vsel %vm891, %v873, %v1753
      %vm1760 = vcmask 523264
      %v1761 = vsel %vm1760, %v1759, %v1757
      %v1762 = vpack.c.bf16 %v1761, %v1761
      %v1763 = vld [vmem:[%s8] sm:$0xf]
      %v1764 = vld [vmem:[%s8 + $0x4] sm:$0xf]
      %v1765 = vld [vmem:[%s8 + $0x8] sm:$0xf]
      %v1766 = vld [vmem:[%s8 + $0xc] sm:$0xf]
      %v1767 = vld [vmem:[%s8 + $0x10] sm:$0xf]
      %v1768 = vld [vmem:[%s8 + $0x14] sm:$0xf]
      %v1769 = vld [vmem:[%s8 + $0x18] sm:$0xf]
      %v1770 = vld [vmem:[%s8 + $0x1c] sm:$0xf]
      %v1771 = vld [vmem:[%s8 + $0x20] sm:$0xf]
      %v1772 = vld [vmem:[%s8 + $0x24] sm:$0xf]
      %v1773 = vld [vmem:[%s8 + $0x28] sm:$0xf]
      %v1774 = vld [vmem:[%s8 + $0x2c] sm:$0xf]
      %v1775 = vld [vmem:[%s9] sm:$0x1]
      %v1777 = vlaneseq
      %v1778 = vshrl.u32 %v1777, 7
      %v1779 = vsub.s32 0, %v1778
      %v1780 = vrot.slane %v1775, %v1779
      %v1794 = vunpack.c.l.b16 %v1763
      %v1795 = vunpack.c.l.b16 %v1764
      %v1796 = vunpack.c.l.b16 %v1765
      %v1797 = vunpack.c.l.b16 %v1766
      %v1798 = vunpack.c.l.b16 %v1767
      %v1799 = vunpack.c.l.b16 %v1768
      %v1800 = vunpack.c.l.b16 %v1769
      %v1801 = vunpack.c.l.b16 %v1770
      %v1802 = vunpack.c.l.b16 %v1771
      %v1803 = vunpack.c.l.b16 %v1772
      %v1804 = vunpack.c.l.b16 %v1773
      %v1805 = vunpack.c.l.b16 %v1774
      %v1806 = vpack.c.b16 %v1795, %v1794
      %v1807 = vpack.c.b16 %v1797, %v1796
      %v1808 = vpack.c.b16 %v1799, %v1798
      %v1809 = vpack.c.b16 %v1801, %v1800
      %v1810 = vpack.c.b16 %v1803, %v1802
      %v1811 = vpack.c.b16 %v1805, %v1804
      %vm1818 = vcmask 785408
      %v1820 = vsel %vm1818, %v1762, 0
      %1822 = vmatprep.subr.bf16.mxu0 0
      %1823 = vmatpush1.bf16.msra.mxu0 %v1806
      %1824 = vmatprep.subr.bf16.mxu0 0
      %1825 = vmatpush1.bf16.msra.mxu0 %v1807
      %1826 = vmatprep.subr.bf16.mxu0 0
      %1827 = vmatpush1.bf16.msra.mxu0 %v1808
      %1828 = vmatprep.subr.bf16.mxu0 0
      %1829 = vmatpush1.bf16.msra.mxu0 %v1809
      %1830 = vmatprep.subr.bf16.mxu0 0
      %1831 = vmatpush1.bf16.msra.mxu0 %v1810
      %1832 = vmatprep.subr.bf16.mxu0 0
      %1833 = vmatpush1.bf16.msra.mxu0 %v1811
      %1834 = vmatprep.subr.bf16.mxu0 0
      %1835 = vmatpush1.bf16.msra.mxu0 0
      %1836 = vmatprep.subr.bf16.mxu0 0
      %1837 = vmatpush1.bf16.msra.mxu0 0
      %1838 = vmatprep.subr.bf16.mxu0 0
      %1839 = vmatpush1.bf16.msra.mxu0 0
      %1840 = vmatprep.subr.bf16.mxu0 0
      %1841 = vmatpush1.bf16.msra.mxu0 0
      %1842 = vmatprep.subr.bf16.mxu0 0
      %1843 = vmatpush1.bf16.msra.mxu0 0
      %1844 = vmatprep.subr.bf16.mxu0 0
      %1845 = vmatpush1.bf16.msra.mxu0 0
      %1846 = vmatprep.subr.bf16.mxu0 0
      %1847 = vmatpush1.bf16.msra.mxu0 0
      %1848 = vmatprep.subr.bf16.mxu0 0
      %1849 = vmatpush1.bf16.msra.mxu0 0
      %1850 = vmatprep.subr.bf16.mxu0 0
      %1851 = vmatpush1.bf16.msra.mxu0 0
      %1852 = vmatprep.subr.bf16.mxu0 0
      %1853 = vmatpush1.bf16.msra.mxu0 0
      %1854 = vmatprep.mubr.bf16.mxu0 0
      %1855 = vmatmul.mubr.bf16.gmra.mrb[0].mxu0 %v1820
      %v1856 = vpop.f32.mrb[0].mxu0
      %v1857 = vadd.f32 %v1780, %v1856
      %v1858 = vpop.f32.mrb[0].mxu0
      %v1859 = vpop.f32.mrb[0].mxu0
      %v1860 = vpop.f32.mrb[0].mxu0
      %1861 = vdwg.mxu0
      %v1862 = vxor.u32 %v1857, 2147483648
      %v1863 = vmul.f32 %v1862, 1.442695
      %v1864 = vpow.pop %v1863
      %v1865 = vadd.f32 %v1864, 1.0
      %v1866 = vrcp.pop %v1865
      %v1867 = vmul.f32 1.0, %v1866
      %v1868 = vtanh.pop %v1857
      %1870 = vrot.lane.b32.xlu0 %v860, 32
      %v1871 = vpop.permute.xlu0 %1870
      %v1873 = vmul.f32 %v1867, %v1871
      %1875 = vrot.lane.b32.xlu0 %v1868, 64
      %v1876 = vpop.permute.xlu0 %1875
      %v1878 = vmul.f32 %v1867, %v1876
      %1880 = vrot.lane.b32.xlu0 %v1878, 32
      %v1881 = vpop.permute.xlu0 %1880
      %v1883 = vadd.f32 %v1873, %v1881
      %v1884 = vtanh.pop %v1883
      %1886 = vrot.lane.b32.xlu0 %v1884, 64
      %v1887 = vpop.permute.xlu0 %1886
      %v1889 = vmul.f32 %v1867, %v1887
      %1891 = vrot.lane.b32.xlu0 %v1889, 96
      %v1892 = vpop.permute.xlu0 %1891
      %v1894 = vsel %vm1760, %v1759, %v1892
      %v1895 = vpack.c.bf16 %v1894, %v1894
      %v1896 = vld [vmem:[%s10] sm:$0xf]
      %v1897 = vld [vmem:[%s10 + $0x4] sm:$0xf]
      %v1898 = vld [vmem:[%s10 + $0x8] sm:$0xf]
      %v1899 = vld [vmem:[%s10 + $0xc] sm:$0xf]
      %v1900 = vld [vmem:[%s10 + $0x10] sm:$0xf]
      %v1901 = vld [vmem:[%s10 + $0x14] sm:$0xf]
      %v1902 = vld [vmem:[%s10 + $0x18] sm:$0xf]
      %v1903 = vld [vmem:[%s10 + $0x1c] sm:$0xf]
      %v1904 = vld [vmem:[%s10 + $0x20] sm:$0xf]
      %v1905 = vld [vmem:[%s10 + $0x24] sm:$0xf]
      %v1906 = vld [vmem:[%s10 + $0x28] sm:$0xf]
      %v1907 = vld [vmem:[%s10 + $0x2c] sm:$0xf]
      %v1908 = vld [vmem:[%s11] sm:$0x1]
      %v1910 = vlaneseq
      %v1911 = vshrl.u32 %v1910, 7
      %v1912 = vsub.s32 0, %v1911
      %v1913 = vrot.slane %v1908, %v1912
      %v1927 = vunpack.c.l.b16 %v1896
      %v1928 = vunpack.c.l.b16 %v1897
      %v1929 = vunpack.c.l.b16 %v1898
      %v1930 = vunpack.c.l.b16 %v1899
      %v1931 = vunpack.c.l.b16 %v1900
      %v1932 = vunpack.c.l.b16 %v1901
      %v1933 = vunpack.c.l.b16 %v1902
      %v1934 = vunpack.c.l.b16 %v1903
      %v1935 = vunpack.c.l.b16 %v1904
      %v1936 = vunpack.c.l.b16 %v1905
      %v1937 = vunpack.c.l.b16 %v1906
      %v1938 = vunpack.c.l.b16 %v1907
      %v1939 = vpack.c.b16 %v1928, %v1927
      %v1940 = vpack.c.b16 %v1930, %v1929
      %v1941 = vpack.c.b16 %v1932, %v1931
      %v1942 = vpack.c.b16 %v1934, %v1933
      %v1943 = vpack.c.b16 %v1936, %v1935
      %v1944 = vpack.c.b16 %v1938, %v1937
      %v1952 = vsel %vm1818, %v1895, 0
      %1954 = vmatprep.subr.bf16.mxu0 0
      %1955 = vmatpush1.bf16.msra.mxu0 %v1939
      %1956 = vmatprep.subr.bf16.mxu0 0
      %1957 = vmatpush1.bf16.msra.mxu0 %v1940
      %1958 = vmatprep.subr.bf16.mxu0 0
      %1959 = vmatpush1.bf16.msra.mxu0 %v1941
      %1960 = vmatprep.subr.bf16.mxu0 0
      %1961 = vmatpush1.bf16.msra.mxu0 %v1942
      %1962 = vmatprep.subr.bf16.mxu0 0
      %1963 = vmatpush1.bf16.msra.mxu0 %v1943
      %1964 = vmatprep.subr.bf16.mxu0 0
      %1965 = vmatpush1.bf16.msra.mxu0 %v1944
      %1966 = vmatprep.subr.bf16.mxu0 0
      %1967 = vmatpush1.bf16.msra.mxu0 0
      %1968 = vmatprep.subr.bf16.mxu0 0
      %1969 = vmatpush1.bf16.msra.mxu0 0
      %1970 = vmatprep.subr.bf16.mxu0 0
      %1971 = vmatpush1.bf16.msra.mxu0 0
      %1972 = vmatprep.subr.bf16.mxu0 0
      %1973 = vmatpush1.bf16.msra.mxu0 0
      %1974 = vmatprep.subr.bf16.mxu0 0
      %1975 = vmatpush1.bf16.msra.mxu0 0
      %1976 = vmatprep.subr.bf16.mxu0 0
      %1977 = vmatpush1.bf16.msra.mxu0 0
      %1978 = vmatprep.subr.bf16.mxu0 0
      %1979 = vmatpush1.bf16.msra.mxu0 0
      %1980 = vmatprep.subr.bf16.mxu0 0
      %1981 = vmatpush1.bf16.msra.mxu0 0
      %1982 = vmatprep.subr.bf16.mxu0 0
      %1983 = vmatpush1.bf16.msra.mxu0 0
      %1984 = vmatprep.subr.bf16.mxu0 0
      %1985 = vmatpush1.bf16.msra.mxu0 0
      %1986 = vmatprep.mubr.bf16.mxu0 0
      %1987 = vmatmul.mubr.bf16.gmra.mrb[0].mxu0 %v1952
      %v1988 = vpop.f32.mrb[0].mxu0
      %v1989 = vadd.f32 %v1913, %v1988
      %v1990 = vpop.f32.mrb[0].mxu0
      %v1991 = vpop.f32.mrb[0].mxu0
      %v1992 = vpop.f32.mrb[0].mxu0
      %1993 = vdwg.mxu0
      %1994 = vst [vmem:[%s473] sm:$0x3] %v1989
      %1995 = vst [vmem:[%s477] sm:$0x3] %v1444
      %1996 = vrot.lane.b32.xlu0 %v1889, 32
      %v1997 = vpop.permute.xlu0 %1996
      %vm1999 = vcmask 254976
      %2000 = vst.msk [vmem:[#allocation2] sm:$0x3] %vm1999, %v1997
      %2002 = vrot.lane.b32.xlu0 %v1883, 96
      %v2003 = vpop.permute.xlu0 %2002
      %2005 = vst.msk [vmem:[#allocation3] sm:$0x3] %vm1999, %v2003
      %v2006 = vsel %vm1427, %v1989, -inf
      %2007 = vmax.xlane.f32.xlu0 %v2006
      %v2008 = vpop.xlane.xlu0 %2007
      %v2009 = vcvt.s32.f32 %v1234
      %vm2010 = vcmp.eq.f32.partialorder %v1989, %v2008
      %v2011 = vsel %vm2010, %v2009, 128.0
      %v2012 = vsel %vm1427, %v2011, inf
      %2013 = vmin.xlane.f32.xlu0 %v2012
      %v2014 = vpop.xlane.xlu0 %2013
      %vm2015 = vcmp.eq.f32.partialorder %v2009, %v2014
      %v2016 = vsel %vm2015, 1, 0
      %v2017 = vcvt.s32.f32 %v2016
      %v2018 = vpack.c.bf16 %v2017, %v2017
      %v2019 = vld [vmem:[%s4] sm:$0xf]
      %v2020 = vld [vmem:[%s4 + $0x4] sm:$0xf]
      %v2021 = vld [vmem:[%s4 + $0x8] sm:$0xf]
      %v2022 = vld [vmem:[%s4 + $0xc] sm:$0xf]
      %v2023 = vld [vmem:[%s4 + $0x10] sm:$0xf]
      %v2024 = vld [vmem:[%s4 + $0x14] sm:$0xf]
      %v2025 = vld [vmem:[%s4 + $0x18] sm:$0xf]
      %v2026 = vld [vmem:[%s4 + $0x1c] sm:$0xf]
      %v2027 = vld [vmem:[%s4 + $0x20] sm:$0xf]
      %v2028 = vld [vmem:[%s4 + $0x24] sm:$0xf]
      %v2029 = vld [vmem:[%s4 + $0x28] sm:$0xf]
      %v2030 = vld [vmem:[%s4 + $0x2c] sm:$0xf]
      %v2031 = vld [vmem:[%s4 + $0x30] sm:$0xf]
      %v2032 = vld [vmem:[%s4 + $0x34] sm:$0xf]
      %v2033 = vld [vmem:[%s4 + $0x38] sm:$0xf]
      %v2034 = vld [vmem:[%s4 + $0x3c] sm:$0xf]
      %v2051 = vunpack.c.l.b16 %v2019
      %v2052 = vunpack.c.l.b16 %v2020
      %v2053 = vunpack.c.l.b16 %v2021
      %v2054 = vunpack.c.l.b16 %v2022
      %v2055 = vunpack.c.l.b16 %v2023
      %v2056 = vunpack.c.l.b16 %v2024
      %v2057 = vunpack.c.l.b16 %v2025
      %v2058 = vunpack.c.l.b16 %v2026
      %v2059 = vunpack.c.l.b16 %v2027
      %v2060 = vunpack.c.l.b16 %v2028
      %v2061 = vunpack.c.l.b16 %v2029
      %v2062 = vunpack.c.l.b16 %v2030
      %v2063 = vunpack.c.l.b16 %v2031
      %v2064 = vunpack.c.l.b16 %v2032
      %v2065 = vunpack.c.l.b16 %v2033
      %v2066 = vunpack.c.l.b16 %v2034
      %v2067 = vpack.c.b16 %v2052, %v2051
      %v2068 = vpack.c.b16 %v2054, %v2053
      %v2069 = vpack.c.b16 %v2056, %v2055
      %v2070 = vpack.c.b16 %v2058, %v2057
      %v2071 = vpack.c.b16 %v2060, %v2059
      %v2072 = vpack.c.b16 %v2062, %v2061
      %v2073 = vpack.c.b16 %v2064, %v2063
      %v2074 = vpack.c.b16 %v2066, %v2065
      %2083 = vmatprep.subr.bf16.mxu0 0
      %2084 = vmatpush1.bf16.msra.mxu0 %v2067
      %2085 = vmatprep.subr.bf16.mxu0 0
      %2086 = vmatpush1.bf16.msra.mxu0 %v2068
      %2087 = vmatprep.subr.bf16.mxu0 0
      %2088 = vmatpush1.bf16.msra.mxu0 %v2069
      %2089 = vmatprep.subr.bf16.mxu0 0
      %2090 = vmatpush1.bf16.msra.mxu0 %v2070
      %2091 = vmatprep.subr.bf16.mxu0 0
      %2092 = vmatpush1.bf16.msra.mxu0 %v2071
      %2093 = vmatprep.subr.bf16.mxu0 0
      %2094 = vmatpush1.bf16.msra.mxu0 %v2072
      %2095 = vmatprep.subr.bf16.mxu0 0
      %2096 = vmatpush1.bf16.msra.mxu0 %v2073
      %2097 = vmatprep.subr.bf16.mxu0 0
      %2098 = vmatpush1.bf16.msra.mxu0 %v2074
      %2099 = vmatprep.subr.bf16.mxu0 0
      %2100 = vmatpush1.bf16.msra.mxu0 0
      %2101 = vmatprep.subr.bf16.mxu0 0
      %2102 = vmatpush1.bf16.msra.mxu0 0
      %2103 = vmatprep.subr.bf16.mxu0 0
      %2104 = vmatpush1.bf16.msra.mxu0 0
      %2105 = vmatprep.subr.bf16.mxu0 0
      %2106 = vmatpush1.bf16.msra.mxu0 0
      %2107 = vmatprep.subr.bf16.mxu0 0
      %2108 = vmatpush1.bf16.msra.mxu0 0
      %2109 = vmatprep.subr.bf16.mxu0 0
      %2110 = vmatpush1.bf16.msra.mxu0 0
      %2111 = vmatprep.subr.bf16.mxu0 0
      %2112 = vmatpush1.bf16.msra.mxu0 0
      %2113 = vmatprep.subr.bf16.mxu0 0
      %2114 = vmatpush1.bf16.msra.mxu0 0
      %2115 = vmatprep.mubr.bf16.mxu0 0
      %2116 = vmatmul.mubr.bf16.gmra.mrb[0].mxu0 %v2018
      %v2117 = vpop.f32.mrb[0].mxu0
      %v2118 = vadd.f32 0.0, %v2117
      %v2119 = vpop.f32.mrb[0].mxu0
      %v2120 = vpop.f32.mrb[0].mxu0
      %v2121 = vpop.f32.mrb[0].mxu0
      %2122 = vdwg.mxu0
      %2123 = vst.msk [vmem:[#allocation4] sm:$0x3] %vm1999, %v2118
      %p2124 = scmp.lt.s32.totalorder %s33, 4
      %s2125 = scalar_select %p2124, %s33, 4
      %s2126 = smul.addr %s2125, 2
      %s2127 = scalar_lea.vmem %s14, %s2126
      %p2128 = scmp.lt.s32.totalorder %s33, 4
      %s2129 = scalar_select %p2128, %s33, 4
      %s2130 = smul.addr %s2129, 2
      %s2131 = scalar_lea.vmem %s15, %s2130
      // Predicated region
      $region77: #{seq2seq_forward.3} parent=71 // pred_check
        %p2132 = pneg %p329
      $region78: #{seq2seq_forward.3} parent=71 // pred_check_branch
        %2134 = sbr.rel (%p2132) target = $region80
      $region79: #{seq2seq_forward.3} parent=71 // pred_region
        _
      $region80: #{seq2seq_forward.3} parent=71 // pred_fallthru
        _
      // Predicated region
      $region81: #{seq2seq_forward.3} parent=71 // pred_check
        %p2135 = pneg %p355
      $region82: #{seq2seq_forward.3} parent=71 // pred_check_branch
        %2137 = sbr.rel (%p2135) target = $region84
      $region83: #{seq2seq_forward.3} parent=71 // pred_region
        _
      $region84: #{seq2seq_forward.3} parent=71 // pred_fallthru
        _
    $region72: #{seq2seq_forward.3} parent=5 // pred_fallthru
      _
    %p2138 = scmp.le.s32.totalorder 2, %s28
    // Predicated region
    $region85: #{seq2seq_forward.3} parent=5 // pred_check
      %p2139 = pneg %p2138
    $region86: #{seq2seq_forward.3} parent=5 // pred_check_branch
      %2141 = sbr.rel (%p2139) target = $region88
    $region87: #{seq2seq_forward.3} parent=5 // pred_region
      %s2142 = ssub.s32 %s28, 2
      // Predicated region
      $region89: #{seq2seq_forward.3} parent=87 // pred_check
        %p2143 = pneg %p335
      $region90: #{seq2seq_forward.3} parent=87 // pred_check_branch
        %2145 = sbr.rel (%p2143) target = $region92
      $region91: #{seq2seq_forward.3} parent=87 // pred_region
        %p2146 = scmp.lt.s32.totalorder %s34, 4
        %s2147 = scalar_select %p2146, %s34, 4
        %s2148 = smul.addr %s2147, 2
        %s2149 = scalar_lea.vmem %s14, %s2148
      $region92: #{seq2seq_forward.3} parent=87 // pred_fallthru
        _
      // Predicated region
      $region93: #{seq2seq_forward.3} parent=87 // pred_check
        %p2150 = pneg %p361
      $region94: #{seq2seq_forward.3} parent=87 // pred_check_branch
        %2152 = sbr.rel (%p2150) target = $region96
      $region95: #{seq2seq_forward.3} parent=87 // pred_region
        %p2153 = scmp.lt.s32.totalorder %s34, 4
        %s2154 = scalar_select %p2153, %s34, 4
        %s2155 = smul.addr %s2154, 2
        %s2156 = scalar_lea.vmem %s15, %s2155
      $region96: #{seq2seq_forward.3} parent=87 // pred_fallthru
        _
    $region88: #{seq2seq_forward.3} parent=5 // pred_fallthru
      _
  $region6: #{seq2seq_forward.3} parent=0 // loop_footer
    %s32 = sadd.s32 1, %s28
  $region7: #{seq2seq_forward.3} parent=0 // loop_footer_branch
    %27 = sbr.rel target = $region3
  $region8: #{seq2seq_forward.3} parent=0 // loop_exit
    _

</llo_original>
